<compile_context>
chip_gen: v6e
topology: v6e:2x2x1
jax: 0.10.0
libtpu: 0.0.40
codegen_flags: <defaults>
</compile_context>

<pallas_src>
import jax
import jax.numpy as jnp
from jax.experimental import pallas as pl
from jax.experimental.pallas import tpu as pltpu

N_CLASSES = 7            # Connect4 has 7 columns
IN_FEATURES = 42         # 6 x 7 board, flattened
HIDDEN1 = 512
HIDDEN2 = 250
N_HEAD = 1 + N_CLASSES   # [v | pi logits] -> one lane-dense 8-wide head matmul

_CPARAMS = pltpu.CompilerParams(
    dimension_semantics=("parallel",),      # rows independent -> megacore-shardable
    vmem_limit_bytes=32 * 1024 * 1024,
)


# ----------------------------- Pallas kernels ------------------------------ #

def _trunk_kernel(x_ref, w1_ref, b1_ref, w2_ref, b2_ref, h2_ref):
    # Linear(42->512) + ReLU, Linear(512->250) + ReLU (the "shared" trunk).
    # bf16 operands into the MXU, f32 accumulation, f32 elementwise, bf16 out.
    x = x_ref[...].astype(jnp.bfloat16)
    h1 = jnp.dot(x, w1_ref[...], preferred_element_type=jnp.float32) + b1_ref[...]
    h1 = jnp.maximum(h1, 0.0)
    h2 = jnp.dot(h1.astype(jnp.bfloat16), w2_ref[...],
                 preferred_element_type=jnp.float32) + b2_ref[...]
    h2_ref[...] = jnp.maximum(h2, 0.0).astype(h2_ref.dtype)


def _heads_kernel(s_ref, wh_ref, bh_ref, out_ref):
    # Fused critic + actor heads: one (rows,512) @ (512,8) matmul.
    # Column 0 = raw v, columns 1..7 = softmax probabilities.
    out = jnp.dot(s_ref[...], wh_ref[...],
                  preferred_element_type=jnp.float32) + bh_ref[...]
    col = jax.lax.broadcasted_iota(jnp.int32, out.shape, 1)
    logits = jnp.where(col >= 1, out, -jnp.inf)       # mask the v column
    m = jnp.max(logits, axis=1, keepdims=True)
    e = jnp.exp(logits - m)                           # col 0 -> exp(-inf) = 0
    denom = jnp.sum(e, axis=1, keepdims=True)
    probs = e * (1.0 / denom)                         # exact divide: rows sum to 1
    out_ref[...] = jnp.where(col == 0, out, probs)


# ------------------------------ tile selection ------------------------------ #

def _trunk_tile(rows):
    # Largest tile (<=1024) that divides the batch and still leaves >= 2 grid
    # steps (so v7x can split rows across its two TensorCores).
    for t in (1024, 512, 256, 128):
        if rows % t == 0 and rows // t >= 2:
            return t
    return 128


def _head_tile(rows):
    # Heads grid uses pl.cdiv, so the tile only needs to be (8,*)-aligned.
    for t in (1024, 512, 256, 128, 64):
        if pl.cdiv(rows, t) >= 2:
            return t
    return 64


# ------------------------------ host wrappers ------------------------------- #

def prepare_params(params):
    """One-time parameter prep (hoisted out of the jitted forward):
    bf16 weight casts + fused [V|P] head weight/bias concatenation."""
    wh = jnp.concatenate([params["wv"], params["wp"]], axis=1)   # (512, 8)
    bh = jnp.concatenate([params["bv"], params["bp"]], axis=1)   # (1, 8)
    return dict(
        w1=params["w1"].astype(jnp.bfloat16),   # (42, 512)
        b1=params["b1"],                        # (1, 512) f32
        w2=params["w2"].astype(jnp.bfloat16),   # (512, 250)
        b2=params["b2"],                        # (1, 250) f32
        wh=wh.astype(jnp.bfloat16),             # (512, 8)
        bh=bh,                                  # (1, 8) f32
    )


def actor_critic_forward(x, prepped):
    """x: (B, 42) f32. B must satisfy (B*250) % 512 == 0 (module reshape quirk)."""
    B = x.shape[0]
    if (B * HIDDEN2) % HIDDEN1 != 0:
        raise ValueError(
            f"batch={B} invalid: the module's reshape(-1, 512) needs batch*250 "
            f"to be a multiple of 512 (smallest valid batch is 256).")

    # ---- trunk: Linear(42,512)+ReLU, Linear(512,250)+ReLU ------------------ #
    tm = _trunk_tile(B)
    h2 = pl.pallas_call(
        _trunk_kernel,
        out_shape=jax.ShapeDtypeStruct((B, HIDDEN2), jnp.bfloat16),
        grid=(B // tm,),
        in_specs=[
            pl.BlockSpec((tm, IN_FEATURES), lambda i: (i, 0)),       # x rows tiled
            pl.BlockSpec((IN_FEATURES, HIDDEN1), lambda i: (0, 0)),  # weights stay
            pl.BlockSpec((1, HIDDEN1), lambda i: (0, 0)),            # resident in
            pl.BlockSpec((HIDDEN1, HIDDEN2), lambda i: (0, 0)),      # VMEM across
            pl.BlockSpec((1, HIDDEN2), lambda i: (0, 0)),            # grid steps
        ],
        out_specs=pl.BlockSpec((tm, HIDDEN2), lambda i: (i, 0)),
        compiler_params=_CPARAMS,
    )(x, prepped["w1"], prepped["b1"], prepped["w2"], prepped["b2"])

    # Reproduces `shared_out = self.shared(state_t).reshape(-1, 512)` exactly.
    # TODO(synk): eliminating this XLA reshape needs a flat HBM scratch + manual
    # DMA inside a single fused pallas_call (no safe Mosaic in-kernel reshape).
    shared_out = h2.reshape(-1, HIDDEN1)
    B2 = shared_out.shape[0]

    # ---- heads: fused [V | P] matmul + softmax ----------------------------- #
    th = _head_tile(B2)
    out = pl.pallas_call(
        _heads_kernel,
        out_shape=jax.ShapeDtypeStruct((B2, N_HEAD), jnp.float32),
        grid=(pl.cdiv(B2, th),),        # partial boundary block masked by Pallas
        in_specs=[
            pl.BlockSpec((th, HIDDEN1), lambda i: (i, 0)),
            pl.BlockSpec((HIDDEN1, N_HEAD), lambda i: (0, 0)),
            pl.BlockSpec((1, N_HEAD), lambda i: (0, 0)),
        ],
        out_specs=pl.BlockSpec((th, N_HEAD), lambda i: (i, 0)),
        compiler_params=_CPARAMS,
    )(shared_out, prepped["wh"], prepped["bh"])

    v = out[:, 0]        # matches `v.squeeze()` for B2 > 1
    pi = out[:, 1:]
    return pi, v


# ------------------------- deterministic parameters ------------------------- #

def init_params(key):
    ks = jax.random.split(key, 8)

    def lin(kw, kb, fan_in, fan_out):
        bound = 1.0 / (float(fan_in) ** 0.5)      # PyTorch default Linear init
        w = jax.random.uniform(kw, (fan_in, fan_out), jnp.float32, -bound, bound)
        b = jax.random.uniform(kb, (1, fan_out), jnp.float32, -bound, bound)
        return w, b

    w1, b1 = lin(ks[0], ks[1], IN_FEATURES, HIDDEN1)
    w2, b2 = lin(ks[2], ks[3], HIDDEN1, HIDDEN2)
    wv, bv = lin(ks[4], ks[5], HIDDEN1, 1)
    wp, bp = lin(ks[6], ks[7], HIDDEN1, N_CLASSES)
    return dict(w1=w1, b1=b1, w2=w2, b2=b2, wv=wv, bv=bv, wp=wp, bp=bp)


def reference_forward(x, p):
    h1 = jnp.maximum(x @ p["w1"] + p["b1"], 0.0)
    h2 = jnp.maximum(h1 @ p["w2"] + p["b2"], 0.0)
    s = h2.reshape(-1, HIDDEN1)
    v = s @ p["wv"] + p["bv"]
    pi = jax.nn.softmax(s @ p["wp"] + p["bp"], axis=1)
    return pi, jnp.squeeze(v)


# ----------------------------------- main ----------------------------------- #

if __name__ == "__main__":
    key = jax.random.PRNGKey(0)
    kx, kp = jax.random.split(key)

    # Smallest batch for which the module's reshape(-1, 512) is legal is 256
    # (256*250 = 125*512), yielding 125 "rows" for the V / P heads.
    B = 256
    x = jax.random.uniform(kx, (B, IN_FEATURES), jnp.float32)
    params = init_params(kp)
    prepped = prepare_params(params)      # one-time prep, outside jit

    fwd = jax.jit(actor_critic_forward)
    pi, v = fwd(x, prepped)
    jax.block_until_ready((pi, v))

    # sanity checks against a pure-JAX f32 reference (bf16 matmuls, f32 accum)
    pi_ref, v_ref = reference_forward(x, params)
    assert pi.shape == (125, N_CLASSES) and v.shape == (125,)
    assert jnp.allclose(jnp.sum(pi, axis=1), 1.0, atol=1e-3)
    assert jnp.allclose(pi, pi_ref, atol=2e-2, rtol=2e-2)
    assert jnp.allclose(v, v_ref, atol=2e-2, rtol=2e-2)

    # TODO(synk): chose_action / calc_loss / optimizer are training-time host
    # logic (Categorical sampling, autograd, Adam) — not part of the forward
    # kernel and intentionally not implemented in Pallas.

    print("KERNEL_OK")
</pallas_src>

<mosaic_0001>
module attributes {stable_mosaic.version = 11 : i64} {
  func.func @_trunk_kernel(%arg0: i32, %arg1: memref<128x42xf32, #tpu.memory_space<vmem>>, %arg2: memref<42x512xbf16, #tpu.memory_space<vmem>>, %arg3: memref<1x512xf32, #tpu.memory_space<vmem>>, %arg4: memref<512x250xbf16, #tpu.memory_space<vmem>>, %arg5: memref<1x250xf32, #tpu.memory_space<vmem>>, %arg6: memref<128x250xbf16, #tpu.memory_space<vmem>>) attributes {dimension_semantics = [#tpu.dimension_semantics<parallel>], iteration_bounds = array<i64: 2>, scalar_prefetch = 0 : i64, scratch_operands = 0 : i64, tpu.core_type = #tpu.core_type<tc>, window_params = [{transform_indices = @transform_0, window_bounds = array<i64: 128, 42>}, {pipeline_mode = #tpu.pipeline_mode<synchronous>, transform_indices = @transform_1, window_bounds = array<i64: 42, 512>}, {pipeline_mode = #tpu.pipeline_mode<synchronous>, transform_indices = @transform_2, window_bounds = array<i64: 1, 512>}, {pipeline_mode = #tpu.pipeline_mode<synchronous>, transform_indices = @transform_3, window_bounds = array<i64: 512, 250>}, {pipeline_mode = #tpu.pipeline_mode<synchronous>, transform_indices = @transform_4, window_bounds = array<i64: 1, 250>}, {transform_indices = @transform_5, window_bounds = array<i64: 128, 250>}]} {
    %c0 = arith.constant 0 : index
    %c0_0 = arith.constant 0 : index
    %0 = vector.load %arg1[%c0, %c0_0] : memref<128x42xf32, #tpu.memory_space<vmem>>, vector<128x42xf32>
    %1 = arith.truncf %0 : vector<128x42xf32> to vector<128x42xbf16>
    %c0_1 = arith.constant 0 : index
    %c0_2 = arith.constant 0 : index
    %2 = vector.load %arg2[%c0_1, %c0_2] : memref<42x512xbf16, #tpu.memory_space<vmem>>, vector<42x512xbf16>
    %cst = arith.constant dense<0.000000e+00> : vector<128x512xf32>
    %3 = tpu.matmul %1, %2, %cst {dimension_numbers = #tpu.dot_dimension_numbers<[1], [0], [0], [1], [0, 0, 1, 1], [], []>} : vector<128x42xbf16>, vector<42x512xbf16>, vector<128x512xf32> -> vector<128x512xf32>
    %c0_3 = arith.constant 0 : index
    %c0_4 = arith.constant 0 : index
    %4 = vector.load %arg3[%c0_3, %c0_4] : memref<1x512xf32, #tpu.memory_space<vmem>>, vector<1x512xf32>
    %5 = vector.broadcast %4 : vector<1x512xf32> to vector<128x512xf32>
    %6 = arith.addf %3, %5 : vector<128x512xf32>
    %cst_5 = arith.constant 0.000000e+00 : f32
    %7 = vector.broadcast %cst_5 : f32 to vector<128x512xf32>
    %8 = arith.maximumf %6, %7 : vector<128x512xf32>
    %9 = arith.truncf %8 : vector<128x512xf32> to vector<128x512xbf16>
    %c0_6 = arith.constant 0 : index
    %c0_7 = arith.constant 0 : index
    %10 = vector.load %arg4[%c0_6, %c0_7] : memref<512x250xbf16, #tpu.memory_space<vmem>>, vector<512x250xbf16>
    %cst_8 = arith.constant dense<0.000000e+00> : vector<128x250xf32>
    %11 = tpu.matmul %9, %10, %cst_8 {dimension_numbers = #tpu.dot_dimension_numbers<[1], [0], [0], [1], [0, 0, 1, 1], [], []>} : vector<128x512xbf16>, vector<512x250xbf16>, vector<128x250xf32> -> vector<128x250xf32>
    %c0_9 = arith.constant 0 : index
    %c0_10 = arith.constant 0 : index
    %12 = vector.load %arg5[%c0_9, %c0_10] : memref<1x250xf32, #tpu.memory_space<vmem>>, vector<1x250xf32>
    %13 = vector.broadcast %12 : vector<1x250xf32> to vector<128x250xf32>
    %14 = arith.addf %11, %13 : vector<128x250xf32>
    %cst_11 = arith.constant 0.000000e+00 : f32
    %15 = vector.broadcast %cst_11 : f32 to vector<128x250xf32>
    %16 = arith.maximumf %14, %15 : vector<128x250xf32>
    %17 = arith.truncf %16 : vector<128x250xf32> to vector<128x250xbf16>
    %c0_12 = arith.constant 0 : index
    %c0_13 = arith.constant 0 : index
    %18 = vector.load %arg6[%c0_12, %c0_13] : memref<128x250xbf16, #tpu.memory_space<vmem>>, vector<128x250xbf16>
    tpu.vector_store %arg6[%c0_12, %c0_13], %17 {strides = array<i32>} : memref<128x250xbf16, #tpu.memory_space<vmem>>, vector<128x250xbf16>,
    return
  }
  func.func @transform_0(%arg0: i32) -> (i32, i32) {
    %c0_i32 = arith.constant 0 : i32
    %c0_i32_0 = arith.constant 0 : i32
    return %arg0, %c0_i32 : i32, i32
  }
  func.func @transform_1(%arg0: i32) -> (i32, i32) {
    %c0_i32 = arith.constant 0 : i32
    %c0_i32_0 = arith.constant 0 : i32
    %c0_i32_1 = arith.constant 0 : i32
    return %c0_i32, %c0_i32_0 : i32, i32
  }
  func.func @transform_2(%arg0: i32) -> (i32, i32) {
    %c0_i32 = arith.constant 0 : i32
    %c0_i32_0 = arith.constant 0 : i32
    %c0_i32_1 = arith.constant 0 : i32
    return %c0_i32, %c0_i32_0 : i32, i32
  }
  func.func @transform_3(%arg0: i32) -> (i32, i32) {
    %c0_i32 = arith.constant 0 : i32
    %c0_i32_0 = arith.constant 0 : i32
    %c0_i32_1 = arith.constant 0 : i32
    return %c0_i32, %c0_i32_0 : i32, i32
  }
  func.func @transform_4(%arg0: i32) -> (i32, i32) {
    %c0_i32 = arith.constant 0 : i32
    %c0_i32_0 = arith.constant 0 : i32
    %c0_i32_1 = arith.constant 0 : i32
    return %c0_i32, %c0_i32_0 : i32, i32
  }
  func.func @transform_5(%arg0: i32) -> (i32, i32) {
    %c0_i32 = arith.constant 0 : i32
    %c0_i32_0 = arith.constant 0 : i32
    return %arg0, %c0_i32 : i32, i32
  }
}

module attributes {stable_mosaic.version = 11 : i64} {
  func.func @_heads_kernel(%arg0: i32, %arg1: memref<64x512xbf16, #tpu.memory_space<vmem>>, %arg2: memref<512x8xbf16, #tpu.memory_space<vmem>>, %arg3: memref<1x8xf32, #tpu.memory_space<vmem>>, %arg4: memref<64x8xf32, #tpu.memory_space<vmem>>) attributes {dimension_semantics = [#tpu.dimension_semantics<parallel>], iteration_bounds = array<i64: 2>, scalar_prefetch = 0 : i64, scratch_operands = 0 : i64, tpu.core_type = #tpu.core_type<tc>, window_params = [{transform_indices = @transform_0, window_bounds = array<i64: 64, 512>}, {pipeline_mode = #tpu.pipeline_mode<synchronous>, transform_indices = @transform_1, window_bounds = array<i64: 512, 8>}, {pipeline_mode = #tpu.pipeline_mode<synchronous>, transform_indices = @transform_2, window_bounds = array<i64: 1, 8>}, {transform_indices = @transform_3, window_bounds = array<i64: 64, 8>}]} {
    %c0 = arith.constant 0 : index
    %c0_0 = arith.constant 0 : index
    %0 = vector.load %arg1[%c0, %c0_0] : memref<64x512xbf16, #tpu.memory_space<vmem>>, vector<64x512xbf16>
    %c0_1 = arith.constant 0 : index
    %c0_2 = arith.constant 0 : index
    %1 = vector.load %arg2[%c0_1, %c0_2] : memref<512x8xbf16, #tpu.memory_space<vmem>>, vector<512x8xbf16>
    %cst = arith.constant dense<0.000000e+00> : vector<64x8xf32>
    %2 = tpu.matmul %0, %1, %cst {dimension_numbers = #tpu.dot_dimension_numbers<[1], [0], [0], [1], [0, 0, 1, 1], [], []>} : vector<64x512xbf16>, vector<512x8xbf16>, vector<64x8xf32> -> vector<64x8xf32>
    %c0_3 = arith.constant 0 : index
    %c0_4 = arith.constant 0 : index
    %3 = vector.load %arg3[%c0_3, %c0_4] : memref<1x8xf32, #tpu.memory_space<vmem>>, vector<1x8xf32>
    %4 = vector.broadcast %3 : vector<1x8xf32> to vector<64x8xf32>
    %5 = arith.addf %2, %4 : vector<64x8xf32>
    %6 = tpu.iota {dimensions = array<i32: 1>} : vector<64x8xi32>
    %c1_i32 = arith.constant 1 : i32
    %7 = vector.broadcast %c1_i32 : i32 to vector<64x8xi32>
    %8 = arith.cmpi sge, %6, %7 : vector<64x8xi32>
    %cst_5 = arith.constant 0xFF800000 : f32
    %9 = vector.broadcast %cst_5 : f32 to vector<64x8xf32>
    %10 = arith.select %8, %5, %9 : vector<64x8xi1>, vector<64x8xf32>
    %cst_6 = arith.constant dense<0xFF800000> : vector<64xf32>
    %11 = vector.multi_reduction <maximumf>, %10, %cst_6 [1] : vector<64x8xf32> to vector<64xf32>
    %12 = vector.shape_cast %11 : vector<64xf32> to vector<64x1xf32>
    %13 = vector.broadcast %12 : vector<64x1xf32> to vector<64x8xf32>
    %14 = arith.subf %10, %13 : vector<64x8xf32>
    %15 = math.exp %14 : vector<64x8xf32>
    %cst_7 = arith.constant dense<0.000000e+00> : vector<64xf32>
    %16 = vector.multi_reduction <add>, %15, %cst_7 [1] : vector<64x8xf32> to vector<64xf32>
    %17 = vector.shape_cast %16 : vector<64xf32> to vector<64x1xf32>
    %cst_8 = arith.constant 1.000000e+00 : f32
    %18 = vector.broadcast %cst_8 : f32 to vector<64x1xf32>
    %19 = arith.divf %18, %17 : vector<64x1xf32>
    %20 = vector.broadcast %19 : vector<64x1xf32> to vector<64x8xf32>
    %21 = arith.mulf %15, %20 : vector<64x8xf32>
    %c0_i32 = arith.constant 0 : i32
    %22 = vector.broadcast %c0_i32 : i32 to vector<64x8xi32>
    %23 = arith.cmpi eq, %6, %22 : vector<64x8xi32>
    %24 = arith.select %23, %5, %21 : vector<64x8xi1>, vector<64x8xf32>
    %c0_9 = arith.constant 0 : index
    %c0_10 = arith.constant 0 : index
    %25 = vector.load %arg4[%c0_9, %c0_10] : memref<64x8xf32, #tpu.memory_space<vmem>>, vector<64x8xf32>
    tpu.vector_store %arg4[%c0_9, %c0_10], %24 {strides = array<i32>} : memref<64x8xf32, #tpu.memory_space<vmem>>, vector<64x8xf32>,
    return
  }
  func.func @transform_0(%arg0: i32) -> (i32, i32) {
    %c0_i32 = arith.constant 0 : i32
    %c0_i32_0 = arith.constant 0 : i32
    return %arg0, %c0_i32 : i32, i32
  }
  func.func @transform_1(%arg0: i32) -> (i32, i32) {
    %c0_i32 = arith.constant 0 : i32
    %c0_i32_0 = arith.constant 0 : i32
    %c0_i32_1 = arith.constant 0 : i32
    return %c0_i32, %c0_i32_0 : i32, i32
  }
  func.func @transform_2(%arg0: i32) -> (i32, i32) {
    %c0_i32 = arith.constant 0 : i32
    %c0_i32_0 = arith.constant 0 : i32
    %c0_i32_1 = arith.constant 0 : i32
    return %c0_i32, %c0_i32_0 : i32, i32
  }
  func.func @transform_3(%arg0: i32) -> (i32, i32) {
    %c0_i32 = arith.constant 0 : i32
    %c0_i32_0 = arith.constant 0 : i32
    return %arg0, %c0_i32 : i32, i32
  }
}

</mosaic_0001>

<llo_original>
// kernel: actor_critic_forward.2
$region0: #{actor_critic_forward.2}
  #allocation0 [shape = 'u32[]', space=smem, size = 0x4, offset = 0x4, fixed_abs, tag = 'smem constant byte address 0x4 - core index']
  #allocation1 [shape = 'u32[144,128]{1,0:T(1,128)}', space=vmem, size = 0x12000, scoped, tag = 'internal scratch']
  %s0 = inlined_call_operand.vmem [shape: f32[256,42], index: 0, kind: input, shape index: {}]
  %s1 = inlined_call_operand.vmem [shape: bf16[42,512], index: 1, kind: input, shape index: {}]
  %s2 = inlined_call_operand.vmem [shape: f32[1,512], index: 2, kind: input, shape index: {}]
  %s3 = inlined_call_operand.hbm [shape: bf16[512,250], index: 3, kind: input, shape index: {}]
  %s4 = inlined_call_operand.vmem [shape: f32[1,250], index: 4, kind: input, shape index: {}]
  %s5 = inlined_call_operand.vmem [shape: bf16[256,250], index: 5, kind: output, shape index: {}]
  %s6 = sld [smem:[#allocation0]]
  $region57: #{actor_critic_forward.2} parent=0
    _
  %s8 = ssub.s32 1, %s6
  %s9 = scalar_select 0, %s8, %s6
  $region1: #{actor_critic_forward.2} parent=0
    #allocation2 [shape = 'u8[262144]{0}', space=vmem, size = 0x40000, scoped, tag = 'input window, operand 3, single buffered']
    #allocation3 [shape = 's32[2]{0}', space=sflag, size = 0x8, scoped, tag = 'scoped memory for actor_critic_forward.2']
    %10 = vsyncpa [#allocation3], 0
    loop: start=0, step=1, limit=4
    $region2: #{actor_critic_forward.2} parent=1 // loop_pre_header
      _
    $region3: #{actor_critic_forward.2} parent=1 // loop_header
      %s12 = sphi 0, %s16
      %p13 = scmp.ge.s32.totalorder %s12, 4
      %s22 = sphi 0, %s24
      %s25 = sphi 0, %s22
      %s26 = sphi 0, %s25
      %s42 = sphi 0, %s26
      %s46 = sphi 0, %s46
      %s48 = sphi 0, %s46
      %s49 = sphi 0, %s48
      %s63 = sphi 0, %s49
      %s67 = sphi 0, %s67
      %s69 = sphi 0, %s67
      %s70 = sphi 0, %s69
      %s84 = sphi 0, %s70
      %s88 = sphi 0, %s88
      %s90 = sphi 0, %s88
      %s91 = sphi 0, %s90
      %s105 = sphi 0, %s91
      %s109 = sphi 0, %s109
      %s111 = sphi 0, %s109
      %s112 = sphi 0, %s111
      %s126 = sphi 0, %s112
      %s132 = sphi 0, %s134
      %s135 = sphi 0, %s132
      %s136 = sphi 0, %s135
      %s152 = sphi 0, %s136
    $region4: #{actor_critic_forward.2} parent=1 // loop_header_branch
      %15 = sbr.rel (%p13) target = $region8
    $region5: #{actor_critic_forward.2} parent=1 // loop_body
      %s17 = ssub.s32 %s12, 1
      %s18 = ssub.s32 %s12, 2
      %s19 = sadd.s32 %s12, 1
      %s20 = ssub.s32 %s12, %s19
      %p21 = scmp.eq.s32.totalorder %s20, 0
      %s23 = sadd.s32 %s22, 1
      %s24 = scalar_select %p21, %s22, %s23
      %p27 = pneg %p21
      %p28 = scmp.eq.s32.totalorder %s12, 1
      %p29 = por %p27, %p28
      %p30 = scmp.ne.s32.totalorder %s22, %s25
      %p31 = scmp.eq.s32.totalorder %s12, 0
      %p32 = por %p30, %p31
      %p33 = scmp.ne.s32.totalorder %s22, %s25
      %p34 = scmp.eq.s32.totalorder %s17, 1
      %p35 = por %p33, %p34
      %p36 = scmp.ne.s32.totalorder %s25, %s26
      %p37 = scmp.eq.s32.totalorder %s17, 0
      %p38 = por %p36, %p37
      %p39 = scmp.ne.s32.totalorder %s25, %s26
      %p40 = scmp.eq.s32.totalorder %s18, 1
      %p41 = por %p39, %p40
      %p43 = scmp.ne.s32.totalorder %s26, %s42
      %p44 = scmp.eq.s32.totalorder %s18, 0
      %p45 = por %p43, %p44
      %s47 = sadd.s32 %s46, 1
      %p50 = scmp.eq.s32.totalorder %s12, 1
      %p51 = scmp.ne.s32.totalorder %s46, %s48
      %p52 = scmp.eq.s32.totalorder %s12, 0
      %p53 = por %p51, %p52
      %p54 = scmp.ne.s32.totalorder %s46, %s48
      %p55 = scmp.eq.s32.totalorder %s17, 1
      %p56 = por %p54, %p55
      %p57 = scmp.ne.s32.totalorder %s48, %s49
      %p58 = scmp.eq.s32.totalorder %s17, 0
      %p59 = por %p57, %p58
      %p60 = scmp.ne.s32.totalorder %s48, %s49
      %p61 = scmp.eq.s32.totalorder %s18, 1
      %p62 = por %p60, %p61
      %p64 = scmp.ne.s32.totalorder %s49, %s63
      %p65 = scmp.eq.s32.totalorder %s18, 0
      %p66 = por %p64, %p65
      %s68 = sadd.s32 %s67, 1
      %p71 = scmp.eq.s32.totalorder %s12, 1
      %p72 = scmp.ne.s32.totalorder %s67, %s69
      %p73 = scmp.eq.s32.totalorder %s12, 0
      %p74 = por %p72, %p73
      %p75 = scmp.ne.s32.totalorder %s67, %s69
      %p76 = scmp.eq.s32.totalorder %s17, 1
      %p77 = por %p75, %p76
      %p78 = scmp.ne.s32.totalorder %s69, %s70
      %p79 = scmp.eq.s32.totalorder %s17, 0
      %p80 = por %p78, %p79
      %p81 = scmp.ne.s32.totalorder %s69, %s70
      %p82 = scmp.eq.s32.totalorder %s18, 1
      %p83 = por %p81, %p82
      %p85 = scmp.ne.s32.totalorder %s70, %s84
      %p86 = scmp.eq.s32.totalorder %s18, 0
      %p87 = por %p85, %p86
      %s89 = sadd.s32 %s88, 1
      %p92 = scmp.eq.s32.totalorder %s12, 1
      %p93 = scmp.ne.s32.totalorder %s88, %s90
      %p94 = scmp.eq.s32.totalorder %s12, 0
      %p95 = por %p93, %p94
      %p96 = scmp.ne.s32.totalorder %s88, %s90
      %p97 = scmp.eq.s32.totalorder %s17, 1
      %p98 = por %p96, %p97
      %p99 = scmp.ne.s32.totalorder %s90, %s91
      %p100 = scmp.eq.s32.totalorder %s17, 0
      %p101 = por %p99, %p100
      %p102 = scmp.ne.s32.totalorder %s90, %s91
      %p103 = scmp.eq.s32.totalorder %s18, 1
      %p104 = por %p102, %p103
      %p106 = scmp.ne.s32.totalorder %s91, %s105
      %p107 = scmp.eq.s32.totalorder %s18, 0
      %p108 = por %p106, %p107
      %s110 = sadd.s32 %s109, 1
      %p113 = scmp.eq.s32.totalorder %s12, 1
      %p114 = scmp.ne.s32.totalorder %s109, %s111
      %p115 = scmp.eq.s32.totalorder %s12, 0
      %p116 = por %p114, %p115
      %p117 = scmp.ne.s32.totalorder %s109, %s111
      %p118 = scmp.eq.s32.totalorder %s17, 1
      %p119 = por %p117, %p118
      %p120 = scmp.ne.s32.totalorder %s111, %s112
      %p121 = scmp.eq.s32.totalorder %s17, 0
      %p122 = por %p120, %p121
      %p123 = scmp.ne.s32.totalorder %s111, %s112
      %p124 = scmp.eq.s32.totalorder %s18, 1
      %p125 = por %p123, %p124
      %p127 = scmp.ne.s32.totalorder %s112, %s126
      %p128 = scmp.eq.s32.totalorder %s18, 0
      %p129 = por %p127, %p128
      %s130 = ssub.s32 %s12, %s19
      %p131 = scmp.eq.s32.totalorder %s130, 0
      %s133 = sadd.s32 %s132, 1
      %s134 = scalar_select %p131, %s132, %s133
      %p137 = pneg %p131
      %p138 = scmp.eq.s32.totalorder %s12, 1
      %p139 = por %p137, %p138
      %p140 = scmp.ne.s32.totalorder %s132, %s135
      %p141 = scmp.eq.s32.totalorder %s12, 0
      %p142 = por %p140, %p141
      %p143 = scmp.ne.s32.totalorder %s132, %s135
      %p144 = scmp.eq.s32.totalorder %s17, 1
      %p145 = por %p143, %p144
      %p146 = scmp.ne.s32.totalorder %s135, %s136
      %p147 = scmp.eq.s32.totalorder %s17, 0
      %p148 = por %p146, %p147
      %p149 = scmp.ne.s32.totalorder %s135, %s136
      %p150 = scmp.eq.s32.totalorder %s18, 1
      %p151 = por %p149, %p150
      %p153 = scmp.ne.s32.totalorder %s136, %s152
      %p154 = scmp.eq.s32.totalorder %s18, 0
      %p155 = por %p153, %p154
      %p156 = scmp.le.s32.totalorder 1, %s12
      %p157 = scmp.lt.s32.totalorder %s12, 3
      %p158 = pnand %p156, %p157
      %p159 = pneg %p158
      // Predicated region
      $region9: #{actor_critic_forward.2} parent=5 // pred_check
        _
      $region10: #{actor_critic_forward.2} parent=5 // pred_check_branch
        %161 = sbr.rel (%p158) target = $region12
      $region11: #{actor_critic_forward.2} parent=5 // pred_region
        %s162 = ssub.s32 %s12, 1
        // Predicated region
        $region13: #{actor_critic_forward.2} parent=11 // pred_check
          %p163 = pneg %p59
        $region14: #{actor_critic_forward.2} parent=11 // pred_check_branch
          %165 = sbr.rel (%p163) target = $region16
        $region15: #{actor_critic_forward.2} parent=11 // pred_region
          _
        $region16: #{actor_critic_forward.2} parent=11 // pred_fallthru
          _
        // Predicated region
        $region17: #{actor_critic_forward.2} parent=11 // pred_check
          %p166 = pneg %p80
        $region18: #{actor_critic_forward.2} parent=11 // pred_check_branch
          %168 = sbr.rel (%p166) target = $region20
        $region19: #{actor_critic_forward.2} parent=11 // pred_region
          _
        $region20: #{actor_critic_forward.2} parent=11 // pred_fallthru
          _
        // Predicated region
        $region21: #{actor_critic_forward.2} parent=11 // pred_check
          %p169 = pneg %p101
        $region22: #{actor_critic_forward.2} parent=11 // pred_check_branch
          %171 = sbr.rel (%p169) target = $region24
        $region23: #{actor_critic_forward.2} parent=11 // pred_region
          %s173 = ssub.s32 8192, 8192
          %174 = vsyncadd [#allocation3], %s173
          %s175 = sshll.u32 [#allocation2], 4
          %s176 = int_to_ptr.vmem [resolvable:$true] %s175
          %181 = dma.hbm_to_vmem [thread:$0]  %s3, 8192, %s176, [#allocation3], 128, 128, 8
        $region24: #{actor_critic_forward.2} parent=11 // pred_fallthru
          _
        // Predicated region
        $region25: #{actor_critic_forward.2} parent=11 // pred_check
          %p182 = pneg %p122
        $region26: #{actor_critic_forward.2} parent=11 // pred_check_branch
          %184 = sbr.rel (%p182) target = $region28
        $region27: #{actor_critic_forward.2} parent=11 // pred_region
          _
        $region28: #{actor_critic_forward.2} parent=11 // pred_fallthru
          _
      $region12: #{actor_critic_forward.2} parent=5 // pred_fallthru
        _
      %p185 = scmp.lt.s32.totalorder %s12, 2
      // Predicated region
      $region29: #{actor_critic_forward.2} parent=5 // pred_check
        %p186 = pneg %p185
      $region30: #{actor_critic_forward.2} parent=5 // pred_check_branch
        %188 = sbr.rel (%p186) target = $region32
      $region31: #{actor_critic_forward.2} parent=5 // pred_region
        // Predicated region
        $region33: #{actor_critic_forward.2} parent=31 // pred_check
          %p189 = pneg %p32
        $region34: #{actor_critic_forward.2} parent=31 // pred_check_branch
          %191 = sbr.rel (%p189) target = $region36
        $region35: #{actor_critic_forward.2} parent=31 // pred_region
          %s192 = smul.u32 16, %s12
          %p193 = scmp.lt.s32.totalorder %s192, 31
          %s194 = scalar_select %p193, %s192, 31
          %s195 = smul.addr %s194, 8
          %s196 = scalar_lea.vmem %s0, %s195
          %s197 = smul.u32 16, %s12
        $region36: #{actor_critic_forward.2} parent=31 // pred_fallthru
          _
      $region32: #{actor_critic_forward.2} parent=5 // pred_fallthru
        _
      %p198 = scmp.le.s32.totalorder 1, %s12
      %p199 = scmp.lt.s32.totalorder %s12, 3
      %p200 = pnand %p198, %p199
      %p201 = pneg %p200
      // Predicated region
      $region37: #{actor_critic_forward.2} parent=5 // pred_check
        _
      $region38: #{actor_critic_forward.2} parent=5 // pred_check_branch
        %203 = sbr.rel (%p200) target = $region40
      $region39: #{actor_critic_forward.2} parent=5 // pred_region
        %s204 = ssub.s32 %s12, 1
        // Predicated region
        $region41: #{actor_critic_forward.2} parent=39 // pred_check
          %p205 = pneg %p101
        $region42: #{actor_critic_forward.2} parent=39 // pred_check_branch
          %207 = sbr.rel (%p205) target = $region44
        $region43: #{actor_critic_forward.2} parent=39 // pred_region
          %208 = dma.done [#allocation3], 8192
        $region44: #{actor_critic_forward.2} parent=39 // pred_fallthru
          _
        %s209 = smul.u32 16, %s17
        %p210 = scmp.lt.s32.totalorder %s209, 31
        %s211 = scalar_select %p210, %s209, 31
        %s212 = smul.addr %s211, 8
        %s213 = scalar_lea.vmem %s0, %s212
        %p214 = pneg %p38
        %p215 = pneg %p35
        %p216 = pneg %p59
        %p217 = pneg %p56
        %p218 = pneg %p80
        %p219 = pneg %p77
        %p220 = pneg %p101
        %p221 = pneg %p98
        %p222 = pneg %p122
        %p223 = pneg %p119
        %p224 = pneg %p148
        %p225 = pneg %p145
        %s226 = smul.u32 16, %s17
        %p227 = scmp.lt.s32.totalorder %s226, 31
        %s228 = scalar_select %p227, %s226, 31
        %s229 = smul.addr %s228, 2
        %s230 = smul.addr %s229, 4
        %s231 = scalar_lea.vmem %s5, %s230
        %s232 = smul.u32 16, %s17
        %p233 = scmp.lt.s32.totalorder %s232, 31
        %s234 = scalar_select %p233, %s232, 31
        %s235 = smul.addr %s234, 8
        %s236 = scalar_lea.vmem %s0, %s235
        %s237 = smul.u32 16, %s17
        %s238 = smul.u32 16, %s17
        %p239 = scmp.lt.s32.totalorder %s238, 31
        %s240 = scalar_select %p239, %s238, 31
        %s241 = smul.addr %s240, 2
        %s242 = smul.addr %s241, 4
        %s243 = scalar_lea.vmem %s5, %s242
        %s244 = smul.u32 16, %s17
        %v246 = vld [vmem:[%s236] sm:$0xff]
        %v247 = vld [vmem:[%s236 + $0x8] sm:$0xff]
        %v248 = vld [vmem:[%s236 + $0x10] sm:$0xff]
        %v249 = vld [vmem:[%s236 + $0x18] sm:$0xff]
        %v250 = vld [vmem:[%s236 + $0x20] sm:$0xff]
        %v251 = vld [vmem:[%s236 + $0x28] sm:$0xff]
        %v252 = vld [vmem:[%s236 + $0x30] sm:$0xff]
        %v253 = vld [vmem:[%s236 + $0x38] sm:$0xff]
        %v254 = vld [vmem:[%s236 + $0x40] sm:$0xff]
        %v255 = vld [vmem:[%s236 + $0x48] sm:$0xff]
        %v256 = vld [vmem:[%s236 + $0x50] sm:$0xff]
        %v257 = vld [vmem:[%s236 + $0x58] sm:$0xff]
        %v258 = vld [vmem:[%s236 + $0x60] sm:$0xff]
        %v259 = vld [vmem:[%s236 + $0x68] sm:$0xff]
        %v260 = vld [vmem:[%s236 + $0x70] sm:$0xff]
        %v261 = vld [vmem:[%s236 + $0x78] sm:$0xff]
        %v262 = vpack.c.bf16 %v247, %v246
        %v263 = vpack.c.bf16 %v249, %v248
        %v264 = vpack.c.bf16 %v251, %v250
        %v265 = vpack.c.bf16 %v253, %v252
        %v266 = vpack.c.bf16 %v255, %v254
        %v267 = vpack.c.bf16 %v257, %v256
        %v268 = vpack.c.bf16 %v259, %v258
        %v269 = vpack.c.bf16 %v261, %v260
        %v270 = vld [vmem:[%s1] sm:$0xff]
        %v271 = vld [vmem:[%s1 + $0x8] sm:$0xff]
        %v272 = vld [vmem:[%s1 + $0x10] sm:$0xff]
        %v273 = vld [vmem:[%s1 + $0x18] sm:$0xff]
        %v274 = vld [vmem:[%s1 + $0x20] sm:$0xff]
        %v275 = vld [vmem:[%s1 + $0x28] sm:$0xff]
        %v276 = vld [vmem:[%s1 + $0x30] sm:$0xff]
        %v277 = vld [vmem:[%s1 + $0x38] sm:$0xff]
        %v278 = vld [vmem:[%s1 + $0x40] sm:$0xff]
        %v279 = vld [vmem:[%s1 + $0x48] sm:$0xff]
        %v280 = vld [vmem:[%s1 + $0x50] sm:$0x11]
        %v281 = vld [vmem:[%s1 + $0x58] sm:$0x11]
        %v282 = vld [vmem:[%s2] sm:$0xf]
        %v284 = vlaneseq
        %v285 = vshrl.u32 %v284, 7
        %v286 = vsub.s32 0, %v285
        %v287 = vrot.slane %v282, %v286
        %v288 = vlaneseq
        %v289 = vshrl.u32 %v288, 7
        %v290 = vsub.s32 1, %v289
        %v291 = vrot.slane %v282, %v290
        %v292 = vlaneseq
        %v293 = vshrl.u32 %v292, 7
        %v294 = vsub.s32 2, %v293
        %v295 = vrot.slane %v282, %v294
        %v296 = vlaneseq
        %v297 = vshrl.u32 %v296, 7
        %v298 = vsub.s32 3, %v297
        %v299 = vrot.slane %v282, %v298
        %v316 = vunpack.c.l.b16 %v270
        %v317 = vunpack.c.h.b16 %v270
        %v318 = vunpack.c.l.b16 %v271
        %v319 = vunpack.c.h.b16 %v271
        %v320 = vunpack.c.l.b16 %v272
        %v321 = vunpack.c.h.b16 %v272
        %v322 = vunpack.c.l.b16 %v273
        %v323 = vunpack.c.h.b16 %v273
        %v324 = vunpack.c.l.b16 %v274
        %v325 = vunpack.c.h.b16 %v274
        %v326 = vunpack.c.l.b16 %v275
        %v327 = vunpack.c.h.b16 %v275
        %v328 = vunpack.c.l.b16 %v276
        %v329 = vunpack.c.h.b16 %v276
        %v330 = vunpack.c.l.b16 %v277
        %v331 = vunpack.c.h.b16 %v277
        %v332 = vunpack.c.l.b16 %v278
        %v333 = vunpack.c.h.b16 %v278
        %v334 = vunpack.c.l.b16 %v279
        %v335 = vunpack.c.h.b16 %v279
        %v336 = vunpack.c.l.b16 %v280
        %v337 = vunpack.c.h.b16 %v280
        %v338 = vunpack.c.l.b16 %v281
        %v339 = vunpack.c.h.b16 %v281
        %v340 = vpack.c.b16 %v320, %v316
        %v341 = vpack.c.b16 %v321, %v317
        %v342 = vpack.c.b16 %v322, %v318
        %v343 = vpack.c.b16 %v323, %v319
        %v344 = vpack.c.b16 %v328, %v324
        %v345 = vpack.c.b16 %v329, %v325
        %v346 = vpack.c.b16 %v330, %v326
        %v347 = vpack.c.b16 %v331, %v327
        %v348 = vpack.c.b16 %v336, %v332
        %v349 = vpack.c.b16 %v337, %v333
        %v350 = vpack.c.b16 %v338, %v334
        %v351 = vpack.c.b16 %v339, %v335
        %vm360 = vcmask 343040
        %v362 = vsel %vm360, %v262, 0
        %v365 = vsel %vm360, %v263, 0
        %v368 = vsel %vm360, %v264, 0
        %v371 = vsel %vm360, %v265, 0
        %v374 = vsel %vm360, %v266, 0
        %v377 = vsel %vm360, %v267, 0
        %v380 = vsel %vm360, %v268, 0
        %v383 = vsel %vm360, %v269, 0
        %vm385 = vcmask 1044480
        %v387 = vsel %vm385, %v348, 0
        %v390 = vsel %vm385, %v349, 0
        %v393 = vsel %vm385, %v350, 0
        %v396 = vsel %vm385, %v351, 0
        %398 = vmatprep.subr.bf16.mxu0 0
        %399 = vmatpush1.bf16.msra.mxu0 0
        %400 = vmatprep.subr.bf16.mxu0 0
        %401 = vmatpush1.bf16.msra.mxu0 0
        %402 = vmatprep.subr.bf16.mxu0 0
        %403 = vmatpush1.bf16.msra.mxu0 0
        %404 = vmatprep.subr.bf16.mxu0 0
        %405 = vmatpush1.bf16.msra.mxu0 0
        %406 = vmatprep.subr.bf16.mxu0 0
        %407 = vmatpush1.bf16.msra.mxu0 0
        %408 = vmatprep.subr.bf16.mxu0 %v390
        %409 = vmatpush1.bf16.msra.mxu0 %v387
        %410 = vmatprep.subr.bf16.mxu0 %v345
        %411 = vmatpush1.bf16.msra.mxu0 %v344
        %412 = vmatprep.subr.bf16.mxu0 %v341
        %413 = vmatpush1.bf16.msra.mxu0 %v340
        %414 = vmatprep.subr.bf16.mxu0 0
        %415 = vmatpush2.bf16.msra.mxu0 0
        %416 = vmatprep.subr.bf16.mxu0 0
        %417 = vmatpush2.bf16.msra.mxu0 0
        %418 = vmatprep.subr.bf16.mxu0 0
        %419 = vmatpush2.bf16.msra.mxu0 0
        %420 = vmatprep.subr.bf16.mxu0 0
        %421 = vmatpush2.bf16.msra.mxu0 0
        %422 = vmatprep.subr.bf16.mxu0 0
        %423 = vmatpush2.bf16.msra.mxu0 0
        %424 = vmatprep.subr.bf16.mxu0 0
        %425 = vmatpush2.bf16.msra.mxu0 0
        %426 = vmatprep.subr.bf16.mxu0 0
        %427 = vmatpush2.bf16.msra.mxu0 0
        %428 = vmatprep.subr.bf16.mxu0 0
        %429 = vmatpush2.bf16.msra.mxu0 0
        %430 = vmatprep.mubr.bf16.mxu0 0
        %431 = vmatmul.mubr.bf16.gmra.mxu0 %v362
        %v432 = vpop.f32.mrf.mxu0
        %v433 = vadd.f32 %v287, %v432
        %v434 = vpop.f32.mrf.mxu0
        %v435 = vadd.f32 %v291, %v434
        %v436 = vpop.f32.mrf.mxu0
        %v437 = vadd.f32 %v287, %v436
        %v438 = vpop.f32.mrf.mxu0
        %v439 = vadd.f32 %v291, %v438
        %440 = vmatprep.mubr.bf16.mxu0 0
        %441 = vmatmul.mubr.bf16.gmra.mxu0 %v365
        %v442 = vpop.f32.mrf.mxu0
        %v443 = vadd.f32 %v287, %v442
        %v444 = vpop.f32.mrf.mxu0
        %v445 = vadd.f32 %v291, %v444
        %v446 = vpop.f32.mrf.mxu0
        %v447 = vadd.f32 %v287, %v446
        %v448 = vpop.f32.mrf.mxu0
        %v449 = vadd.f32 %v291, %v448
        %450 = vmatprep.mubr.bf16.mxu0 0
        %451 = vmatmul.mubr.bf16.gmra.mxu0 %v368
        %v452 = vpop.f32.mrf.mxu0
        %v453 = vadd.f32 %v287, %v452
        %v454 = vpop.f32.mrf.mxu0
        %v455 = vadd.f32 %v291, %v454
        %v456 = vpop.f32.mrf.mxu0
        %v457 = vadd.f32 %v287, %v456
        %v458 = vpop.f32.mrf.mxu0
        %v459 = vadd.f32 %v291, %v458
        %460 = vmatprep.mubr.bf16.mxu0 0
        %461 = vmatmul.mubr.bf16.gmra.mxu0 %v371
        %v462 = vpop.f32.mrf.mxu0
        %v463 = vadd.f32 %v287, %v462
        %v464 = vpop.f32.mrf.mxu0
        %v465 = vadd.f32 %v291, %v464
        %v466 = vpop.f32.mrf.mxu0
        %v467 = vadd.f32 %v287, %v466
        %v468 = vpop.f32.mrf.mxu0
        %v469 = vadd.f32 %v291, %v468
        %470 = vmatprep.mubr.bf16.mxu0 0
        %471 = vmatmul.mubr.bf16.gmra.mxu0 %v374
        %v472 = vpop.f32.mrf.mxu0
        %v473 = vadd.f32 %v287, %v472
        %v474 = vpop.f32.mrf.mxu0
        %v475 = vadd.f32 %v291, %v474
        %v476 = vpop.f32.mrf.mxu0
        %v477 = vadd.f32 %v287, %v476
        %v478 = vpop.f32.mrf.mxu0
        %v479 = vadd.f32 %v291, %v478
        %480 = vmatprep.mubr.bf16.mxu0 0
        %481 = vmatmul.mubr.bf16.gmra.mxu0 %v377
        %v482 = vpop.f32.mrf.mxu0
        %v483 = vadd.f32 %v287, %v482
        %v484 = vpop.f32.mrf.mxu0
        %v485 = vadd.f32 %v291, %v484
        %v486 = vpop.f32.mrf.mxu0
        %v487 = vadd.f32 %v287, %v486
        %v488 = vpop.f32.mrf.mxu0
        %v489 = vadd.f32 %v291, %v488
        %490 = vmatprep.mubr.bf16.mxu0 0
        %491 = vmatmul.mubr.bf16.gmra.mxu0 %v380
        %v492 = vpop.f32.mrf.mxu0
        %v493 = vadd.f32 %v287, %v492
        %v494 = vpop.f32.mrf.mxu0
        %v495 = vadd.f32 %v291, %v494
        %v496 = vpop.f32.mrf.mxu0
        %v497 = vadd.f32 %v287, %v496
        %v498 = vpop.f32.mrf.mxu0
        %v499 = vadd.f32 %v291, %v498
        %500 = vmatprep.mubr.bf16.mxu0 0
        %501 = vmatmul.mubr.bf16.gmra.mxu0 %v383
        %v502 = vpop.f32.mrf.mxu0
        %v503 = vadd.f32 %v287, %v502
        %v504 = vpop.f32.mrf.mxu0
        %v505 = vadd.f32 %v291, %v504
        %v506 = vpop.f32.mrf.mxu0
        %v507 = vadd.f32 %v287, %v506
        %v508 = vpop.f32.mrf.mxu0
        %v509 = vadd.f32 %v291, %v508
        %510 = vdwg.mxu0
        %511 = vmatprep.subr.bf16.mxu0 0
        %512 = vmatpush1.bf16.msra.mxu0 0
        %513 = vmatprep.subr.bf16.mxu0 0
        %514 = vmatpush1.bf16.msra.mxu0 0
        %515 = vmatprep.subr.bf16.mxu0 0
        %516 = vmatpush1.bf16.msra.mxu0 0
        %517 = vmatprep.subr.bf16.mxu0 0
        %518 = vmatpush1.bf16.msra.mxu0 0
        %519 = vmatprep.subr.bf16.mxu0 0
        %520 = vmatpush1.bf16.msra.mxu0 0
        %521 = vmatprep.subr.bf16.mxu0 %v396
        %522 = vmatpush1.bf16.msra.mxu0 %v393
        %523 = vmatprep.subr.bf16.mxu0 %v347
        %524 = vmatpush1.bf16.msra.mxu0 %v346
        %525 = vmatprep.subr.bf16.mxu0 %v343
        %526 = vmatpush1.bf16.msra.mxu0 %v342
        %527 = vmatprep.subr.bf16.mxu0 0
        %528 = vmatpush2.bf16.msra.mxu0 0
        %529 = vmatprep.subr.bf16.mxu0 0
        %530 = vmatpush2.bf16.msra.mxu0 0
        %531 = vmatprep.subr.bf16.mxu0 0
        %532 = vmatpush2.bf16.msra.mxu0 0
        %533 = vmatprep.subr.bf16.mxu0 0
        %534 = vmatpush2.bf16.msra.mxu0 0
        %535 = vmatprep.subr.bf16.mxu0 0
        %536 = vmatpush2.bf16.msra.mxu0 0
        %537 = vmatprep.subr.bf16.mxu0 0
        %538 = vmatpush2.bf16.msra.mxu0 0
        %539 = vmatprep.subr.bf16.mxu0 0
        %540 = vmatpush2.bf16.msra.mxu0 0
        %541 = vmatprep.subr.bf16.mxu0 0
        %542 = vmatpush2.bf16.msra.mxu0 0
        %543 = vmatprep.mubr.bf16.mxu0 0
        %544 = vmatmul.mubr.bf16.gmra.mxu0 %v362
        %v545 = vpop.f32.mrf.mxu0
        %v546 = vadd.f32 %v295, %v545
        %v547 = vpop.f32.mrf.mxu0
        %v548 = vadd.f32 %v299, %v547
        %v549 = vpop.f32.mrf.mxu0
        %v550 = vadd.f32 %v295, %v549
        %v551 = vpop.f32.mrf.mxu0
        %v552 = vadd.f32 %v299, %v551
        %553 = vmatprep.mubr.bf16.mxu0 0
        %554 = vmatmul.mubr.bf16.gmra.mxu0 %v365
        %v555 = vpop.f32.mrf.mxu0
        %v556 = vadd.f32 %v295, %v555
        %v557 = vpop.f32.mrf.mxu0
        %v558 = vadd.f32 %v299, %v557
        %v559 = vpop.f32.mrf.mxu0
        %v560 = vadd.f32 %v295, %v559
        %v561 = vpop.f32.mrf.mxu0
        %v562 = vadd.f32 %v299, %v561
        %563 = vmatprep.mubr.bf16.mxu0 0
        %564 = vmatmul.mubr.bf16.gmra.mxu0 %v368
        %v565 = vpop.f32.mrf.mxu0
        %v566 = vadd.f32 %v295, %v565
        %v567 = vpop.f32.mrf.mxu0
        %v568 = vadd.f32 %v299, %v567
        %v569 = vpop.f32.mrf.mxu0
        %v570 = vadd.f32 %v295, %v569
        %v571 = vpop.f32.mrf.mxu0
        %v572 = vadd.f32 %v299, %v571
        %573 = vmatprep.mubr.bf16.mxu0 0
        %574 = vmatmul.mubr.bf16.gmra.mxu0 %v371
        %v575 = vpop.f32.mrf.mxu0
        %v576 = vadd.f32 %v295, %v575
        %v577 = vpop.f32.mrf.mxu0
        %v578 = vadd.f32 %v299, %v577
        %v579 = vpop.f32.mrf.mxu0
        %v580 = vadd.f32 %v295, %v579
        %v581 = vpop.f32.mrf.mxu0
        %v582 = vadd.f32 %v299, %v581
        %583 = vmatprep.mubr.bf16.mxu0 0
        %584 = vmatmul.mubr.bf16.gmra.mxu0 %v374
        %v585 = vpop.f32.mrf.mxu0
        %v586 = vadd.f32 %v295, %v585
        %v587 = vpop.f32.mrf.mxu0
        %v588 = vadd.f32 %v299, %v587
        %v589 = vpop.f32.mrf.mxu0
        %v590 = vadd.f32 %v295, %v589
        %v591 = vpop.f32.mrf.mxu0
        %v592 = vadd.f32 %v299, %v591
        %593 = vmatprep.mubr.bf16.mxu0 0
        %594 = vmatmul.mubr.bf16.gmra.mxu0 %v377
        %v595 = vpop.f32.mrf.mxu0
        %v596 = vadd.f32 %v295, %v595
        %v597 = vpop.f32.mrf.mxu0
        %v598 = vadd.f32 %v299, %v597
        %v599 = vpop.f32.mrf.mxu0
        %v600 = vadd.f32 %v295, %v599
        %v601 = vpop.f32.mrf.mxu0
        %v602 = vadd.f32 %v299, %v601
        %603 = vmatprep.mubr.bf16.mxu0 0
        %604 = vmatmul.mubr.bf16.gmra.mxu0 %v380
        %v605 = vpop.f32.mrf.mxu0
        %v606 = vadd.f32 %v295, %v605
        %v607 = vpop.f32.mrf.mxu0
        %v608 = vadd.f32 %v299, %v607
        %v609 = vpop.f32.mrf.mxu0
        %v610 = vadd.f32 %v295, %v609
        %v611 = vpop.f32.mrf.mxu0
        %v612 = vadd.f32 %v299, %v611
        %613 = vmatprep.mubr.bf16.mxu0 0
        %614 = vmatmul.mubr.bf16.gmra.mxu0 %v383
        %v615 = vpop.f32.mrf.mxu0
        %v616 = vadd.f32 %v295, %v615
        %v617 = vpop.f32.mrf.mxu0
        %v618 = vadd.f32 %v299, %v617
        %v619 = vpop.f32.mrf.mxu0
        %v620 = vadd.f32 %v295, %v619
        %v621 = vpop.f32.mrf.mxu0
        %v622 = vadd.f32 %v299, %v621
        %623 = vdwg.mxu0
        %v624 = vmax.f32 %v433, 0.0
        %v625 = vmax.f32 %v435, 0.0
        %v626 = vmax.f32 %v546, 0.0
        %v627 = vmax.f32 %v548, 0.0
        %v628 = vmax.f32 %v437, 0.0
        %v629 = vmax.f32 %v439, 0.0
        %v630 = vmax.f32 %v550, 0.0
        %v631 = vmax.f32 %v552, 0.0
        %v632 = vmax.f32 %v443, 0.0
        %v633 = vmax.f32 %v445, 0.0
        %v634 = vmax.f32 %v556, 0.0
        %v635 = vmax.f32 %v558, 0.0
        %v636 = vmax.f32 %v447, 0.0
        %v637 = vmax.f32 %v449, 0.0
        %v638 = vmax.f32 %v560, 0.0
        %v639 = vmax.f32 %v562, 0.0
        %v640 = vmax.f32 %v453, 0.0
        %v641 = vmax.f32 %v455, 0.0
        %v642 = vmax.f32 %v566, 0.0
        %v643 = vmax.f32 %v568, 0.0
        %v644 = vmax.f32 %v457, 0.0
        %v645 = vmax.f32 %v459, 0.0
        %v646 = vmax.f32 %v570, 0.0
        %v647 = vmax.f32 %v572, 0.0
        %v648 = vmax.f32 %v463, 0.0
        %v649 = vmax.f32 %v465, 0.0
        %v650 = vmax.f32 %v576, 0.0
        %v651 = vmax.f32 %v578, 0.0
        %v652 = vmax.f32 %v467, 0.0
        %v653 = vmax.f32 %v469, 0.0
        %v654 = vmax.f32 %v580, 0.0
        %v655 = vmax.f32 %v582, 0.0
        %v656 = vmax.f32 %v473, 0.0
        %v657 = vmax.f32 %v475, 0.0
        %v658 = vmax.f32 %v586, 0.0
        %v659 = vmax.f32 %v588, 0.0
        %v660 = vmax.f32 %v477, 0.0
        %v661 = vmax.f32 %v479, 0.0
        %v662 = vmax.f32 %v590, 0.0
        %v663 = vmax.f32 %v592, 0.0
        %v664 = vmax.f32 %v483, 0.0
        %v665 = vmax.f32 %v485, 0.0
        %v666 = vmax.f32 %v596, 0.0
        %v667 = vmax.f32 %v598, 0.0
        %v668 = vmax.f32 %v487, 0.0
        %v669 = vmax.f32 %v489, 0.0
        %v670 = vmax.f32 %v600, 0.0
        %v671 = vmax.f32 %v602, 0.0
        %v672 = vmax.f32 %v493, 0.0
        %v673 = vmax.f32 %v495, 0.0
        %v674 = vmax.f32 %v606, 0.0
        %v675 = vmax.f32 %v608, 0.0
        %v676 = vmax.f32 %v497, 0.0
        %v677 = vmax.f32 %v499, 0.0
        %v678 = vmax.f32 %v610, 0.0
        %v679 = vmax.f32 %v612, 0.0
        %v680 = vmax.f32 %v503, 0.0
        %v681 = vmax.f32 %v505, 0.0
        %v682 = vmax.f32 %v616, 0.0
        %v683 = vmax.f32 %v618, 0.0
        %v684 = vmax.f32 %v507, 0.0
        %v685 = vmax.f32 %v509, 0.0
        %v686 = vmax.f32 %v620, 0.0
        %v687 = vmax.f32 %v622, 0.0
        %v688 = vpack.c.bf16 %v628, %v624
        %v689 = vpack.c.bf16 %v629, %v625
        %v690 = vpack.c.bf16 %v630, %v626
        %v691 = vpack.c.bf16 %v631, %v627
        %v692 = vpack.c.bf16 %v636, %v632
        %v693 = vpack.c.bf16 %v637, %v633
        %v694 = vpack.c.bf16 %v638, %v634
        %v695 = vpack.c.bf16 %v639, %v635
        %v696 = vpack.c.bf16 %v644, %v640
        %v697 = vpack.c.bf16 %v645, %v641
        %v698 = vpack.c.bf16 %v646, %v642
        %v699 = vpack.c.bf16 %v647, %v643
        %v700 = vpack.c.bf16 %v652, %v648
        %v701 = vpack.c.bf16 %v653, %v649
        %v702 = vpack.c.bf16 %v654, %v650
        %v703 = vpack.c.bf16 %v655, %v651
        %v704 = vpack.c.bf16 %v660, %v656
        %v705 = vpack.c.bf16 %v661, %v657
        %v706 = vpack.c.bf16 %v662, %v658
        %v707 = vpack.c.bf16 %v663, %v659
        %v708 = vpack.c.bf16 %v668, %v664
        %v709 = vpack.c.bf16 %v669, %v665
        %v710 = vpack.c.bf16 %v670, %v666
        %v711 = vpack.c.bf16 %v671, %v667
        %v712 = vpack.c.bf16 %v676, %v672
        %v713 = vpack.c.bf16 %v677, %v673
        %v714 = vpack.c.bf16 %v678, %v674
        %v715 = vpack.c.bf16 %v679, %v675
        %v716 = vpack.c.bf16 %v684, %v680
        %v717 = vpack.c.bf16 %v685, %v681
        %v718 = vpack.c.bf16 %v686, %v682
        %v719 = vpack.c.bf16 %v687, %v683
        %v720 = vld [vmem:[#allocation2] sm:$0xff]
        %v721 = vld [vmem:[#allocation2 + $0x8] sm:$0xff]
        %v722 = vld [vmem:[#allocation2 + $0x10] sm:$0xff]
        %v723 = vld [vmem:[#allocation2 + $0x18] sm:$0xff]
        %v724 = vld [vmem:[#allocation2 + $0x20] sm:$0xff]
        %v725 = vld [vmem:[#allocation2 + $0x28] sm:$0xff]
        %v726 = vld [vmem:[#allocation2 + $0x30] sm:$0xff]
        %v727 = vld [vmem:[#allocation2 + $0x38] sm:$0xff]
        %v728 = vld [vmem:[#allocation2 + $0x40] sm:$0xff]
        %v729 = vld [vmem:[#allocation2 + $0x48] sm:$0xff]
        %v730 = vld [vmem:[#allocation2 + $0x50] sm:$0xff]
        %v731 = vld [vmem:[#allocation2 + $0x58] sm:$0xff]
        %v732 = vld [vmem:[#allocation2 + $0x60] sm:$0xff]
        %v733 = vld [vmem:[#allocation2 + $0x68] sm:$0xff]
        %v734 = vld [vmem:[#allocation2 + $0x70] sm:$0xff]
        %v735 = vld [vmem:[#allocation2 + $0x78] sm:$0xff]
        %v736 = vld [vmem:[#allocation2 + $0x80] sm:$0xff]
        %v737 = vld [vmem:[#allocation2 + $0x88] sm:$0xff]
        %v738 = vld [vmem:[#allocation2 + $0x90] sm:$0xff]
        %v739 = vld [vmem:[#allocation2 + $0x98] sm:$0xff]
        %v740 = vld [vmem:[#allocation2 + $0xa0] sm:$0xff]
        %v741 = vld [vmem:[#allocation2 + $0xa8] sm:$0xff]
        %v742 = vld [vmem:[#allocation2 + $0xb0] sm:$0xff]
        %v743 = vld [vmem:[#allocation2 + $0xb8] sm:$0xff]
        %v744 = vld [vmem:[#allocation2 + $0xc0] sm:$0xff]
        %v745 = vld [vmem:[#allocation2 + $0xc8] sm:$0xff]
        %v746 = vld [vmem:[#allocation2 + $0xd0] sm:$0xff]
        %v747 = vld [vmem:[#allocation2 + $0xd8] sm:$0xff]
        %v748 = vld [vmem:[#allocation2 + $0xe0] sm:$0xff]
        %v749 = vld [vmem:[#allocation2 + $0xe8] sm:$0xff]
        %v750 = vld [vmem:[#allocation2 + $0xf0] sm:$0xff]
        %v751 = vld [vmem:[#allocation2 + $0xf8] sm:$0xff]
        %v752 = vld [vmem:[#allocation2 + $0x100] sm:$0xff]
        %v753 = vld [vmem:[#allocation2 + $0x108] sm:$0xff]
        %v754 = vld [vmem:[#allocation2 + $0x110] sm:$0xff]
        %v755 = vld [vmem:[#allocation2 + $0x118] sm:$0xff]
        %v756 = vld [vmem:[#allocation2 + $0x120] sm:$0xff]
        %v757 = vld [vmem:[#allocation2 + $0x128] sm:$0xff]
        %v758 = vld [vmem:[#allocation2 + $0x130] sm:$0xff]
        %v759 = vld [vmem:[#allocation2 + $0x138] sm:$0xff]
        %v760 = vld [vmem:[#allocation2 + $0x140] sm:$0xff]
        %v761 = vld [vmem:[#allocation2 + $0x148] sm:$0xff]
        %v762 = vld [vmem:[#allocation2 + $0x150] sm:$0xff]
        %v763 = vld [vmem:[#allocation2 + $0x158] sm:$0xff]
        %v764 = vld [vmem:[#allocation2 + $0x160] sm:$0xff]
        %v765 = vld [vmem:[#allocation2 + $0x168] sm:$0xff]
        %v766 = vld [vmem:[#allocation2 + $0x170] sm:$0xff]
        %v767 = vld [vmem:[#allocation2 + $0x178] sm:$0xff]
        %v768 = vld [vmem:[#allocation2 + $0x180] sm:$0xff]
        %v769 = vld [vmem:[#allocation2 + $0x188] sm:$0xff]
        %v770 = vld [vmem:[#allocation2 + $0x190] sm:$0xff]
        %v771 = vld [vmem:[#allocation2 + $0x198] sm:$0xff]
        %v772 = vld [vmem:[#allocation2 + $0x1a0] sm:$0xff]
        %v773 = vld [vmem:[#allocation2 + $0x1a8] sm:$0xff]
        %v774 = vld [vmem:[#allocation2 + $0x1b0] sm:$0xff]
        %v775 = vld [vmem:[#allocation2 + $0x1b8] sm:$0xff]
        %v776 = vld [vmem:[#allocation2 + $0x1c0] sm:$0xff]
        %v777 = vld [vmem:[#allocation2 + $0x1c8] sm:$0xff]
        %v778 = vld [vmem:[#allocation2 + $0x1d0] sm:$0xff]
        %v779 = vld [vmem:[#allocation2 + $0x1d8] sm:$0xff]
        %v780 = vld [vmem:[#allocation2 + $0x1e0] sm:$0xff]
        %v781 = vld [vmem:[#allocation2 + $0x1e8] sm:$0xff]
        %v782 = vld [vmem:[#allocation2 + $0x1f0] sm:$0xff]
        %v783 = vld [vmem:[#allocation2 + $0x1f8] sm:$0xff]
        %v784 = vld [vmem:[%s4] sm:$0x3]
        %v786 = vlaneseq
        %v787 = vshrl.u32 %v786, 7
        %v788 = vsub.s32 0, %v787
        %v789 = vrot.slane %v784, %v788
        %v790 = vlaneseq
        %v791 = vshrl.u32 %v790, 7
        %v792 = vsub.s32 1, %v791
        %v793 = vrot.slane %v784, %v792
        %v860 = vunpack.c.l.b16 %v720
        %v861 = vunpack.c.h.b16 %v720
        %v862 = vunpack.c.l.b16 %v721
        %v863 = vunpack.c.h.b16 %v721
        %v864 = vunpack.c.l.b16 %v722
        %v865 = vunpack.c.h.b16 %v722
        %v866 = vunpack.c.l.b16 %v723
        %v867 = vunpack.c.h.b16 %v723
        %v868 = vunpack.c.l.b16 %v724
        %v869 = vunpack.c.h.b16 %v724
        %v870 = vunpack.c.l.b16 %v725
        %v871 = vunpack.c.h.b16 %v725
        %v872 = vunpack.c.l.b16 %v726
        %v873 = vunpack.c.h.b16 %v726
        %v874 = vunpack.c.l.b16 %v727
        %v875 = vunpack.c.h.b16 %v727
        %v876 = vunpack.c.l.b16 %v728
        %v877 = vunpack.c.h.b16 %v728
        %v878 = vunpack.c.l.b16 %v729
        %v879 = vunpack.c.h.b16 %v729
        %v880 = vunpack.c.l.b16 %v730
        %v881 = vunpack.c.h.b16 %v730
        %v882 = vunpack.c.l.b16 %v731
        %v883 = vunpack.c.h.b16 %v731
        %v884 = vunpack.c.l.b16 %v732
        %v885 = vunpack.c.h.b16 %v732
        %v886 = vunpack.c.l.b16 %v733
        %v887 = vunpack.c.h.b16 %v733
        %v888 = vunpack.c.l.b16 %v734
        %v889 = vunpack.c.h.b16 %v734
        %v890 = vunpack.c.l.b16 %v735
        %v891 = vunpack.c.h.b16 %v735
        %v892 = vunpack.c.l.b16 %v736
        %v893 = vunpack.c.h.b16 %v736
        %v894 = vunpack.c.l.b16 %v737
        %v895 = vunpack.c.h.b16 %v737
        %v896 = vunpack.c.l.b16 %v738
        %v897 = vunpack.c.h.b16 %v738
        %v898 = vunpack.c.l.b16 %v739
        %v899 = vunpack.c.h.b16 %v739
        %v900 = vunpack.c.l.b16 %v740
        %v901 = vunpack.c.h.b16 %v740
        %v902 = vunpack.c.l.b16 %v741
        %v903 = vunpack.c.h.b16 %v741
        %v904 = vunpack.c.l.b16 %v742
        %v905 = vunpack.c.h.b16 %v742
        %v906 = vunpack.c.l.b16 %v743
        %v907 = vunpack.c.h.b16 %v743
        %v908 = vunpack.c.l.b16 %v744
        %v909 = vunpack.c.h.b16 %v744
        %v910 = vunpack.c.l.b16 %v745
        %v911 = vunpack.c.h.b16 %v745
        %v912 = vunpack.c.l.b16 %v746
        %v913 = vunpack.c.h.b16 %v746
        %v914 = vunpack.c.l.b16 %v747
        %v915 = vunpack.c.h.b16 %v747
        %v916 = vunpack.c.l.b16 %v748
        %v917 = vunpack.c.h.b16 %v748
        %v918 = vunpack.c.l.b16 %v749
        %v919 = vunpack.c.h.b16 %v749
        %v920 = vunpack.c.l.b16 %v750
        %v921 = vunpack.c.h.b16 %v750
        %v922 = vunpack.c.l.b16 %v751
        %v923 = vunpack.c.h.b16 %v751
        %v924 = vunpack.c.l.b16 %v752
        %v925 = vunpack.c.h.b16 %v752
        %v926 = vunpack.c.l.b16 %v753
        %v927 = vunpack.c.h.b16 %v753
        %v928 = vunpack.c.l.b16 %v754
        %v929 = vunpack.c.h.b16 %v754
        %v930 = vunpack.c.l.b16 %v755
        %v931 = vunpack.c.h.b16 %v755
        %v932 = vunpack.c.l.b16 %v756
        %v933 = vunpack.c.h.b16 %v756
        %v934 = vunpack.c.l.b16 %v757
        %v935 = vunpack.c.h.b16 %v757
        %v936 = vunpack.c.l.b16 %v758
        %v937 = vunpack.c.h.b16 %v758
        %v938 = vunpack.c.l.b16 %v759
        %v939 = vunpack.c.h.b16 %v759
        %v940 = vunpack.c.l.b16 %v760
        %v941 = vunpack.c.h.b16 %v760
        %v942 = vunpack.c.l.b16 %v761
        %v943 = vunpack.c.h.b16 %v761
        %v944 = vunpack.c.l.b16 %v762
        %v945 = vunpack.c.h.b16 %v762
        %v946 = vunpack.c.l.b16 %v763
        %v947 = vunpack.c.h.b16 %v763
        %v948 = vunpack.c.l.b16 %v764
        %v949 = vunpack.c.h.b16 %v764
        %v950 = vunpack.c.l.b16 %v765
        %v951 = vunpack.c.h.b16 %v765
        %v952 = vunpack.c.l.b16 %v766
        %v953 = vunpack.c.h.b16 %v766
        %v954 = vunpack.c.l.b16 %v767
        %v955 = vunpack.c.h.b16 %v767
        %v956 = vunpack.c.l.b16 %v768
        %v957 = vunpack.c.h.b16 %v768
        %v958 = vunpack.c.l.b16 %v769
        %v959 = vunpack.c.h.b16 %v769
        %v960 = vunpack.c.l.b16 %v770
        %v961 = vunpack.c.h.b16 %v770
        %v962 = vunpack.c.l.b16 %v771
        %v963 = vunpack.c.h.b16 %v771
        %v964 = vunpack.c.l.b16 %v772
        %v965 = vunpack.c.h.b16 %v772
        %v966 = vunpack.c.l.b16 %v773
        %v967 = vunpack.c.h.b16 %v773
        %v968 = vunpack.c.l.b16 %v774
        %v969 = vunpack.c.h.b16 %v774
        %v970 = vunpack.c.l.b16 %v775
        %v971 = vunpack.c.h.b16 %v775
        %v972 = vunpack.c.l.b16 %v776
        %v973 = vunpack.c.h.b16 %v776
        %v974 = vunpack.c.l.b16 %v777
        %v975 = vunpack.c.h.b16 %v777
        %v976 = vunpack.c.l.b16 %v778
        %v977 = vunpack.c.h.b16 %v778
        %v978 = vunpack.c.l.b16 %v779
        %v979 = vunpack.c.h.b16 %v779
        %v980 = vunpack.c.l.b16 %v780
        %v981 = vunpack.c.h.b16 %v780
        %v982 = vunpack.c.l.b16 %v781
        %v983 = vunpack.c.h.b16 %v781
        %v984 = vunpack.c.l.b16 %v782
        %v985 = vunpack.c.h.b16 %v782
        %v986 = vunpack.c.l.b16 %v783
        %v987 = vunpack.c.h.b16 %v783
        %v988 = vpack.c.b16 %v862, %v860
        %v989 = vpack.c.b16 %v863, %v861
        %v990 = vpack.c.b16 %v866, %v864
        %v991 = vpack.c.b16 %v867, %v865
        %v992 = vpack.c.b16 %v870, %v868
        %v993 = vpack.c.b16 %v871, %v869
        %v994 = vpack.c.b16 %v874, %v872
        %v995 = vpack.c.b16 %v875, %v873
        %v996 = vpack.c.b16 %v878, %v876
        %v997 = vpack.c.b16 %v879, %v877
        %v998 = vpack.c.b16 %v882, %v880
        %v999 = vpack.c.b16 %v883, %v881
        %v1000 = vpack.c.b16 %v886, %v884
        %v1001 = vpack.c.b16 %v887, %v885
        %v1002 = vpack.c.b16 %v890, %v888
        %v1003 = vpack.c.b16 %v891, %v889
        %v1004 = vpack.c.b16 %v894, %v892
        %v1005 = vpack.c.b16 %v895, %v893
        %v1006 = vpack.c.b16 %v898, %v896
        %v1007 = vpack.c.b16 %v899, %v897
        %v1008 = vpack.c.b16 %v902, %v900
        %v1009 = vpack.c.b16 %v903, %v901
        %v1010 = vpack.c.b16 %v906, %v904
        %v1011 = vpack.c.b16 %v907, %v905
        %v1012 = vpack.c.b16 %v910, %v908
        %v1013 = vpack.c.b16 %v911, %v909
        %v1014 = vpack.c.b16 %v914, %v912
        %v1015 = vpack.c.b16 %v915, %v913
        %v1016 = vpack.c.b16 %v918, %v916
        %v1017 = vpack.c.b16 %v919, %v917
        %v1018 = vpack.c.b16 %v922, %v920
        %v1019 = vpack.c.b16 %v923, %v921
        %v1020 = vpack.c.b16 %v926, %v924
        %v1021 = vpack.c.b16 %v927, %v925
        %v1022 = vpack.c.b16 %v930, %v928
        %v1023 = vpack.c.b16 %v931, %v929
        %v1024 = vpack.c.b16 %v934, %v932
        %v1025 = vpack.c.b16 %v935, %v933
        %v1026 = vpack.c.b16 %v938, %v936
        %v1027 = vpack.c.b16 %v939, %v937
        %v1028 = vpack.c.b16 %v942, %v940
        %v1029 = vpack.c.b16 %v943, %v941
        %v1030 = vpack.c.b16 %v946, %v944
        %v1031 = vpack.c.b16 %v947, %v945
        %v1032 = vpack.c.b16 %v950, %v948
        %v1033 = vpack.c.b16 %v951, %v949
        %v1034 = vpack.c.b16 %v954, %v952
        %v1035 = vpack.c.b16 %v955, %v953
        %v1036 = vpack.c.b16 %v958, %v956
        %v1037 = vpack.c.b16 %v959, %v957
        %v1038 = vpack.c.b16 %v962, %v960
        %v1039 = vpack.c.b16 %v963, %v961
        %v1040 = vpack.c.b16 %v966, %v964
        %v1041 = vpack.c.b16 %v967, %v965
        %v1042 = vpack.c.b16 %v970, %v968
        %v1043 = vpack.c.b16 %v971, %v969
        %v1044 = vpack.c.b16 %v974, %v972
        %v1045 = vpack.c.b16 %v975, %v973
        %v1046 = vpack.c.b16 %v978, %v976
        %v1047 = vpack.c.b16 %v979, %v977
        %v1048 = vpack.c.b16 %v982, %v980
        %v1049 = vpack.c.b16 %v983, %v981
        %v1050 = vpack.c.b16 %v986, %v984
        %v1051 = vpack.c.b16 %v987, %v985
        %1116 = vmatprep.subr.bf16.mxu0 %v1003
        %1117 = vmatpush1.bf16.msra.mxu0 %v1002
        %1118 = vmatprep.subr.bf16.mxu0 %v1001
        %1119 = vmatpush1.bf16.msra.mxu0 %v1000
        %1120 = vmatprep.subr.bf16.mxu0 %v999
        %1121 = vmatpush1.bf16.msra.mxu0 %v998
        %1122 = vmatprep.subr.bf16.mxu0 %v997
        %1123 = vmatpush1.bf16.msra.mxu0 %v996
        %1124 = vmatprep.subr.bf16.mxu0 %v995
        %1125 = vmatpush1.bf16.msra.mxu0 %v994
        %1126 = vmatprep.subr.bf16.mxu0 %v993
        %1127 = vmatpush1.bf16.msra.mxu0 %v992
        %1128 = vmatprep.subr.bf16.mxu0 %v991
        %1129 = vmatpush1.bf16.msra.mxu0 %v990
        %1130 = vmatprep.subr.bf16.mxu0 %v989
        %1131 = vmatpush1.bf16.msra.mxu0 %v988
        %1132 = vmatprep.subr.bf16.mxu0 %v1019
        %1133 = vmatpush2.bf16.msra.mxu0 %v1018
        %1134 = vmatprep.subr.bf16.mxu0 %v1017
        %1135 = vmatpush2.bf16.msra.mxu0 %v1016
        %1136 = vmatprep.subr.bf16.mxu0 %v1015
        %1137 = vmatpush2.bf16.msra.mxu0 %v1014
        %1138 = vmatprep.subr.bf16.mxu0 %v1013
        %1139 = vmatpush2.bf16.msra.mxu0 %v1012
        %1140 = vmatprep.subr.bf16.mxu0 %v1011
        %1141 = vmatpush2.bf16.msra.mxu0 %v1010
        %1142 = vmatprep.subr.bf16.mxu0 %v1009
        %1143 = vmatpush2.bf16.msra.mxu0 %v1008
        %1144 = vmatprep.subr.bf16.mxu0 %v1007
        %1145 = vmatpush2.bf16.msra.mxu0 %v1006
        %1146 = vmatprep.subr.bf16.mxu0 %v1005
        %1147 = vmatpush2.bf16.msra.mxu0 %v1004
        %1148 = vmatprep.mubr.bf16.mxu0 %v689
        %1149 = vmatmul.mubr.bf16.gmra.mxu0 %v688
        %v1150 = vpop.f32.mrf.mxu0
        %v1151 = vadd.f32 %v789, %v1150
        %v1152 = vpop.f32.mrf.mxu0
        %v1153 = vadd.f32 %v793, %v1152
        %v1154 = vpop.f32.mrf.mxu0
        %v1155 = vadd.f32 %v789, %v1154
        %v1156 = vpop.f32.mrf.mxu0
        %v1157 = vadd.f32 %v793, %v1156
        %1158 = vmatprep.mubr.bf16.mxu0 %v693
        %1159 = vmatmul.mubr.bf16.gmra.mxu0 %v692
        %v1160 = vpop.f32.mrf.mxu0
        %v1161 = vadd.f32 %v789, %v1160
        %v1162 = vpop.f32.mrf.mxu0
        %v1163 = vadd.f32 %v793, %v1162
        %v1164 = vpop.f32.mrf.mxu0
        %v1165 = vadd.f32 %v789, %v1164
        %v1166 = vpop.f32.mrf.mxu0
        %v1167 = vadd.f32 %v793, %v1166
        %1168 = vmatprep.mubr.bf16.mxu0 %v697
        %1169 = vmatmul.mubr.bf16.gmra.mxu0 %v696
        %v1170 = vpop.f32.mrf.mxu0
        %v1171 = vadd.f32 %v789, %v1170
        %v1172 = vpop.f32.mrf.mxu0
        %v1173 = vadd.f32 %v793, %v1172
        %v1174 = vpop.f32.mrf.mxu0
        %v1175 = vadd.f32 %v789, %v1174
        %v1176 = vpop.f32.mrf.mxu0
        %v1177 = vadd.f32 %v793, %v1176
        %1178 = vmatprep.mubr.bf16.mxu0 %v701
        %1179 = vmatmul.mubr.bf16.gmra.mxu0 %v700
        %v1180 = vpop.f32.mrf.mxu0
        %v1181 = vadd.f32 %v789, %v1180
        %v1182 = vpop.f32.mrf.mxu0
        %v1183 = vadd.f32 %v793, %v1182
        %v1184 = vpop.f32.mrf.mxu0
        %v1185 = vadd.f32 %v789, %v1184
        %v1186 = vpop.f32.mrf.mxu0
        %v1187 = vadd.f32 %v793, %v1186
        %1188 = vmatprep.mubr.bf16.mxu0 %v705
        %1189 = vmatmul.mubr.bf16.gmra.mxu0 %v704
        %v1190 = vpop.f32.mrf.mxu0
        %v1191 = vadd.f32 %v789, %v1190
        %v1192 = vpop.f32.mrf.mxu0
        %v1193 = vadd.f32 %v793, %v1192
        %v1194 = vpop.f32.mrf.mxu0
        %v1195 = vadd.f32 %v789, %v1194
        %v1196 = vpop.f32.mrf.mxu0
        %v1197 = vadd.f32 %v793, %v1196
        %1198 = vmatprep.mubr.bf16.mxu0 %v709
        %1199 = vmatmul.mubr.bf16.gmra.mxu0 %v708
        %v1200 = vpop.f32.mrf.mxu0
        %v1201 = vadd.f32 %v789, %v1200
        %v1202 = vpop.f32.mrf.mxu0
        %v1203 = vadd.f32 %v793, %v1202
        %v1204 = vpop.f32.mrf.mxu0
        %v1205 = vadd.f32 %v789, %v1204
        %v1206 = vpop.f32.mrf.mxu0
        %v1207 = vadd.f32 %v793, %v1206
        %1208 = vmatprep.mubr.bf16.mxu0 %v713
        %1209 = vmatmul.mubr.bf16.gmra.mxu0 %v712
        %v1210 = vpop.f32.mrf.mxu0
        %v1211 = vadd.f32 %v789, %v1210
        %v1212 = vpop.f32.mrf.mxu0
        %v1213 = vadd.f32 %v793, %v1212
        %v1214 = vpop.f32.mrf.mxu0
        %v1215 = vadd.f32 %v789, %v1214
        %v1216 = vpop.f32.mrf.mxu0
        %v1217 = vadd.f32 %v793, %v1216
        %1218 = vmatprep.mubr.bf16.mxu0 %v717
        %1219 = vmatmul.mubr.bf16.gmra.mxu0 %v716
        %v1220 = vpop.f32.mrf.mxu0
        %v1221 = vadd.f32 %v789, %v1220
        %v1222 = vpop.f32.mrf.mxu0
        %v1223 = vadd.f32 %v793, %v1222
        %v1224 = vpop.f32.mrf.mxu0
        %v1225 = vadd.f32 %v789, %v1224
        %v1226 = vpop.f32.mrf.mxu0
        %v1227 = vadd.f32 %v793, %v1226
        %1228 = vdwg.mxu0
        %1229 = vmatprep.subr.bf16.mxu0 %v1035
        %1230 = vmatpush1.bf16.msra.mxu0 %v1034
        %1231 = vmatprep.subr.bf16.mxu0 %v1033
        %1232 = vmatpush1.bf16.msra.mxu0 %v1032
        %1233 = vmatprep.subr.bf16.mxu0 %v1031
        %1234 = vmatpush1.bf16.msra.mxu0 %v1030
        %1235 = vmatprep.subr.bf16.mxu0 %v1029
        %1236 = vmatpush1.bf16.msra.mxu0 %v1028
        %1237 = vmatprep.subr.bf16.mxu0 %v1027
        %1238 = vmatpush1.bf16.msra.mxu0 %v1026
        %1239 = vmatprep.subr.bf16.mxu0 %v1025
        %1240 = vmatpush1.bf16.msra.mxu0 %v1024
        %1241 = vmatprep.subr.bf16.mxu0 %v1023
        %1242 = vmatpush1.bf16.msra.mxu0 %v1022
        %1243 = vmatprep.subr.bf16.mxu0 %v1021
        %1244 = vmatpush1.bf16.msra.mxu0 %v1020
        %1245 = vmatprep.subr.bf16.mxu0 %v1051
        %1246 = vmatpush2.bf16.msra.mxu0 %v1050
        %1247 = vmatprep.subr.bf16.mxu0 %v1049
        %1248 = vmatpush2.bf16.msra.mxu0 %v1048
        %1249 = vmatprep.subr.bf16.mxu0 %v1047
        %1250 = vmatpush2.bf16.msra.mxu0 %v1046
        %1251 = vmatprep.subr.bf16.mxu0 %v1045
        %1252 = vmatpush2.bf16.msra.mxu0 %v1044
        %1253 = vmatprep.subr.bf16.mxu0 %v1043
        %1254 = vmatpush2.bf16.msra.mxu0 %v1042
        %1255 = vmatprep.subr.bf16.mxu0 %v1041
        %1256 = vmatpush2.bf16.msra.mxu0 %v1040
        %1257 = vmatprep.subr.bf16.mxu0 %v1039
        %1258 = vmatpush2.bf16.msra.mxu0 %v1038
        %1259 = vmatprep.subr.bf16.mxu0 %v1037
        %1260 = vmatpush2.bf16.msra.mxu0 %v1036
        %1261 = vmatprep.mubr.bf16.mxu0 %v691
        %1262 = vmatmul.mubr.bf16.gmra.mxu0 %v690
        %v1263 = vpop.f32.mrf.mxu0
        %v1264 = vadd.f32 %v1151, %v1263
        %v1265 = vpop.f32.mrf.mxu0
        %v1266 = vadd.f32 %v1153, %v1265
        %v1267 = vpop.f32.mrf.mxu0
        %v1268 = vadd.f32 %v1155, %v1267
        %v1269 = vpop.f32.mrf.mxu0
        %v1270 = vadd.f32 %v1157, %v1269
        %1271 = vmatprep.mubr.bf16.mxu0 %v695
        %1272 = vmatmul.mubr.bf16.gmra.mxu0 %v694
        %v1273 = vpop.f32.mrf.mxu0
        %v1274 = vadd.f32 %v1161, %v1273
        %v1275 = vpop.f32.mrf.mxu0
        %v1276 = vadd.f32 %v1163, %v1275
        %v1277 = vpop.f32.mrf.mxu0
        %v1278 = vadd.f32 %v1165, %v1277
        %v1279 = vpop.f32.mrf.mxu0
        %v1280 = vadd.f32 %v1167, %v1279
        %1281 = vmatprep.mubr.bf16.mxu0 %v699
        %1282 = vmatmul.mubr.bf16.gmra.mxu0 %v698
        %v1283 = vpop.f32.mrf.mxu0
        %v1284 = vadd.f32 %v1171, %v1283
        %v1285 = vpop.f32.mrf.mxu0
        %v1286 = vadd.f32 %v1173, %v1285
        %v1287 = vpop.f32.mrf.mxu0
        %v1288 = vadd.f32 %v1175, %v1287
        %v1289 = vpop.f32.mrf.mxu0
        %v1290 = vadd.f32 %v1177, %v1289
        %1291 = vmatprep.mubr.bf16.mxu0 %v703
        %1292 = vmatmul.mubr.bf16.gmra.mxu0 %v702
        %v1293 = vpop.f32.mrf.mxu0
        %v1294 = vadd.f32 %v1181, %v1293
        %v1295 = vpop.f32.mrf.mxu0
        %v1296 = vadd.f32 %v1183, %v1295
        %v1297 = vpop.f32.mrf.mxu0
        %v1298 = vadd.f32 %v1185, %v1297
        %v1299 = vpop.f32.mrf.mxu0
        %v1300 = vadd.f32 %v1187, %v1299
        %1301 = vmatprep.mubr.bf16.mxu0 %v707
        %1302 = vmatmul.mubr.bf16.gmra.mxu0 %v706
        %v1303 = vpop.f32.mrf.mxu0
        %v1304 = vadd.f32 %v1191, %v1303
        %v1305 = vpop.f32.mrf.mxu0
        %v1306 = vadd.f32 %v1193, %v1305
        %v1307 = vpop.f32.mrf.mxu0
        %v1308 = vadd.f32 %v1195, %v1307
        %v1309 = vpop.f32.mrf.mxu0
        %v1310 = vadd.f32 %v1197, %v1309
        %1311 = vmatprep.mubr.bf16.mxu0 %v711
        %1312 = vmatmul.mubr.bf16.gmra.mxu0 %v710
        %v1313 = vpop.f32.mrf.mxu0
        %v1314 = vadd.f32 %v1201, %v1313
        %v1315 = vpop.f32.mrf.mxu0
        %v1316 = vadd.f32 %v1203, %v1315
        %v1317 = vpop.f32.mrf.mxu0
        %v1318 = vadd.f32 %v1205, %v1317
        %v1319 = vpop.f32.mrf.mxu0
        %v1320 = vadd.f32 %v1207, %v1319
        %1321 = vmatprep.mubr.bf16.mxu0 %v715
        %1322 = vmatmul.mubr.bf16.gmra.mxu0 %v714
        %v1323 = vpop.f32.mrf.mxu0
        %v1324 = vadd.f32 %v1211, %v1323
        %v1325 = vpop.f32.mrf.mxu0
        %v1326 = vadd.f32 %v1213, %v1325
        %v1327 = vpop.f32.mrf.mxu0
        %v1328 = vadd.f32 %v1215, %v1327
        %v1329 = vpop.f32.mrf.mxu0
        %v1330 = vadd.f32 %v1217, %v1329
        %1331 = vmatprep.mubr.bf16.mxu0 %v719
        %1332 = vmatmul.mubr.bf16.gmra.mxu0 %v718
        %v1333 = vpop.f32.mrf.mxu0
        %v1334 = vadd.f32 %v1221, %v1333
        %v1335 = vpop.f32.mrf.mxu0
        %v1336 = vadd.f32 %v1223, %v1335
        %v1337 = vpop.f32.mrf.mxu0
        %v1338 = vadd.f32 %v1225, %v1337
        %v1339 = vpop.f32.mrf.mxu0
        %v1340 = vadd.f32 %v1227, %v1339
        %1341 = vdwg.mxu0
        %v1342 = vmax.f32 %v1264, 0.0
        %v1343 = vmax.f32 %v1266, 0.0
        %v1344 = vmax.f32 %v1268, 0.0
        %v1345 = vmax.f32 %v1270, 0.0
        %v1346 = vmax.f32 %v1274, 0.0
        %v1347 = vmax.f32 %v1276, 0.0
        %v1348 = vmax.f32 %v1278, 0.0
        %v1349 = vmax.f32 %v1280, 0.0
        %v1350 = vmax.f32 %v1284, 0.0
        %v1351 = vmax.f32 %v1286, 0.0
        %v1352 = vmax.f32 %v1288, 0.0
        %v1353 = vmax.f32 %v1290, 0.0
        %v1354 = vmax.f32 %v1294, 0.0
        %v1355 = vmax.f32 %v1296, 0.0
        %v1356 = vmax.f32 %v1298, 0.0
        %v1357 = vmax.f32 %v1300, 0.0
        %v1358 = vmax.f32 %v1304, 0.0
        %v1359 = vmax.f32 %v1306, 0.0
        %v1360 = vmax.f32 %v1308, 0.0
        %v1361 = vmax.f32 %v1310, 0.0
        %v1362 = vmax.f32 %v1314, 0.0
        %v1363 = vmax.f32 %v1316, 0.0
        %v1364 = vmax.f32 %v1318, 0.0
        %v1365 = vmax.f32 %v1320, 0.0
        %v1366 = vmax.f32 %v1324, 0.0
        %v1367 = vmax.f32 %v1326, 0.0
        %v1368 = vmax.f32 %v1328, 0.0
        %v1369 = vmax.f32 %v1330, 0.0
        %v1370 = vmax.f32 %v1334, 0.0
        %v1371 = vmax.f32 %v1336, 0.0
        %v1372 = vmax.f32 %v1338, 0.0
        %v1373 = vmax.f32 %v1340, 0.0
        %v1374 = vpack.c.bf16 %v1344, %v1342
        %v1375 = vpack.c.bf16 %v1345, %v1343
        %v1376 = vpack.c.bf16 %v1348, %v1346
        %v1377 = vpack.c.bf16 %v1349, %v1347
        %v1378 = vpack.c.bf16 %v1352, %v1350
        %v1379 = vpack.c.bf16 %v1353, %v1351
        %v1380 = vpack.c.bf16 %v1356, %v1354
        %v1381 = vpack.c.bf16 %v1357, %v1355
        %v1382 = vpack.c.bf16 %v1360, %v1358
        %v1383 = vpack.c.bf16 %v1361, %v1359
        %v1384 = vpack.c.bf16 %v1364, %v1362
        %v1385 = vpack.c.bf16 %v1365, %v1363
        %v1386 = vpack.c.bf16 %v1368, %v1366
        %v1387 = vpack.c.bf16 %v1369, %v1367
        %v1388 = vpack.c.bf16 %v1372, %v1370
        %v1389 = vpack.c.bf16 %v1373, %v1371
        %v1406 = vunpack.c.l.b16 %v1374
        %v1407 = vunpack.c.l.b16 %v1375
        %v1408 = vunpack.c.h.b16 %v1374
        %v1409 = vunpack.c.h.b16 %v1375
        %v1410 = vunpack.c.l.b16 %v1376
        %v1411 = vunpack.c.l.b16 %v1377
        %v1412 = vunpack.c.h.b16 %v1376
        %v1413 = vunpack.c.h.b16 %v1377
        %v1414 = vunpack.c.l.b16 %v1378
        %v1415 = vunpack.c.l.b16 %v1379
        %v1416 = vunpack.c.h.b16 %v1378
        %v1417 = vunpack.c.h.b16 %v1379
        %v1418 = vunpack.c.l.b16 %v1380
        %v1419 = vunpack.c.l.b16 %v1381
        %v1420 = vunpack.c.h.b16 %v1380
        %v1421 = vunpack.c.h.b16 %v1381
        %v1422 = vunpack.c.l.b16 %v1382
        %v1423 = vunpack.c.l.b16 %v1383
        %v1424 = vunpack.c.h.b16 %v1382
        %v1425 = vunpack.c.h.b16 %v1383
        %v1426 = vunpack.c.l.b16 %v1384
        %v1427 = vunpack.c.l.b16 %v1385
        %v1428 = vunpack.c.h.b16 %v1384
        %v1429 = vunpack.c.h.b16 %v1385
        %v1430 = vunpack.c.l.b16 %v1386
        %v1431 = vunpack.c.l.b16 %v1387
        %v1432 = vunpack.c.h.b16 %v1386
        %v1433 = vunpack.c.h.b16 %v1387
        %v1434 = vunpack.c.l.b16 %v1388
        %v1435 = vunpack.c.l.b16 %v1389
        %v1436 = vunpack.c.h.b16 %v1388
        %v1437 = vunpack.c.h.b16 %v1389
        %v1438 = vpack.c.b16 %v1407, %v1406
        %v1439 = vpack.c.b16 %v1409, %v1408
        %v1440 = vpack.c.b16 %v1411, %v1410
        %v1441 = vpack.c.b16 %v1413, %v1412
        %v1442 = vpack.c.b16 %v1415, %v1414
        %v1443 = vpack.c.b16 %v1417, %v1416
        %v1444 = vpack.c.b16 %v1419, %v1418
        %v1445 = vpack.c.b16 %v1421, %v1420
        %v1446 = vpack.c.b16 %v1423, %v1422
        %v1447 = vpack.c.b16 %v1425, %v1424
        %v1448 = vpack.c.b16 %v1427, %v1426
        %v1449 = vpack.c.b16 %v1429, %v1428
        %v1450 = vpack.c.b16 %v1431, %v1430
        %v1451 = vpack.c.b16 %v1433, %v1432
        %v1452 = vpack.c.b16 %v1435, %v1434
        %v1453 = vpack.c.b16 %v1437, %v1436
        %vm1470 = vcmask 1043456
        %vm1471 = vcmask 998404
        %vm1472 = vmor %vm1471, %vm1470
        %1473 = vst.msk [vmem:[%s243] sm:$0xff] %vm1472, %v1438
        %1474 = vst.msk [vmem:[%s243 + $0x8] sm:$0xff] %vm1472, %v1439
        %1475 = vst.msk [vmem:[%s243 + $0x10] sm:$0xff] %vm1472, %v1440
        %1476 = vst.msk [vmem:[%s243 + $0x18] sm:$0xff] %vm1472, %v1441
        %1477 = vst.msk [vmem:[%s243 + $0x20] sm:$0xff] %vm1472, %v1442
        %1478 = vst.msk [vmem:[%s243 + $0x28] sm:$0xff] %vm1472, %v1443
        %1479 = vst.msk [vmem:[%s243 + $0x30] sm:$0xff] %vm1472, %v1444
        %1480 = vst.msk [vmem:[%s243 + $0x38] sm:$0xff] %vm1472, %v1445
        %1481 = vst.msk [vmem:[%s243 + $0x40] sm:$0xff] %vm1472, %v1446
        %1482 = vst.msk [vmem:[%s243 + $0x48] sm:$0xff] %vm1472, %v1447
        %1483 = vst.msk [vmem:[%s243 + $0x50] sm:$0xff] %vm1472, %v1448
        %1484 = vst.msk [vmem:[%s243 + $0x58] sm:$0xff] %vm1472, %v1449
        %1485 = vst.msk [vmem:[%s243 + $0x60] sm:$0xff] %vm1472, %v1450
        %1486 = vst.msk [vmem:[%s243 + $0x68] sm:$0xff] %vm1472, %v1451
        %1487 = vst.msk [vmem:[%s243 + $0x70] sm:$0xff] %vm1472, %v1452
        %1488 = vst.msk [vmem:[%s243 + $0x78] sm:$0xff] %vm1472, %v1453
        %s1489 = smul.u32 16, %s17
        %p1490 = scmp.lt.s32.totalorder %s1489, 31
        %s1491 = scalar_select %p1490, %s1489, 31
        %s1492 = smul.addr %s1491, 2
        %s1493 = smul.addr %s1492, 4
        %s1494 = scalar_lea.vmem %s5, %s1493
        // Predicated region
        $region45: #{actor_critic_forward.2} parent=39 // pred_check
          %p1495 = pneg %p145
        $region46: #{actor_critic_forward.2} parent=39 // pred_check_branch
          %1497 = sbr.rel (%p1495) target = $region48
        $region47: #{actor_critic_forward.2} parent=39 // pred_region
          %s1498 = smul.u32 16, %s17
        $region48: #{actor_critic_forward.2} parent=39 // pred_fallthru
          _
      $region40: #{actor_critic_forward.2} parent=5 // pred_fallthru
        _
      %p1499 = scmp.le.s32.totalorder 2, %s12
      // Predicated region
      $region49: #{actor_critic_forward.2} parent=5 // pred_check
        %p1500 = pneg %p1499
      $region50: #{actor_critic_forward.2} parent=5 // pred_check_branch
        %1502 = sbr.rel (%p1500) target = $region52
      $region51: #{actor_critic_forward.2} parent=5 // pred_region
        %s1503 = ssub.s32 %s12, 2
        // Predicated region
        $region53: #{actor_critic_forward.2} parent=51 // pred_check
          %p1504 = pneg %p151
        $region54: #{actor_critic_forward.2} parent=51 // pred_check_branch
          %1506 = sbr.rel (%p1504) target = $region56
        $region55: #{actor_critic_forward.2} parent=51 // pred_region
          %s1507 = smul.u32 16, %s18
          %p1508 = scmp.lt.s32.totalorder %s1507, 31
          %s1509 = scalar_select %p1508, %s1507, 31
          %s1510 = smul.addr %s1509, 2
          %s1511 = smul.addr %s1510, 4
          %s1512 = scalar_lea.vmem %s5, %s1511
        $region56: #{actor_critic_forward.2} parent=51 // pred_fallthru
          _
      $region52: #{actor_critic_forward.2} parent=5 // pred_fallthru
        _
    $region6: #{actor_critic_forward.2} parent=1 // loop_footer
      %s16 = sadd.s32 1, %s12
    $region7: #{actor_critic_forward.2} parent=1 // loop_footer_branch
      %11 = sbr.rel target = $region3
    $region8: #{actor_critic_forward.2} parent=1 // loop_exit
      _
    %1513 = vsyncpa [#allocation3], 1
    %s1514 = scalar_lea.sflag [#allocation3], 1
    %1515 = vsyncpa %s1514, 1

// kernel: actor_critic_forward.3
$region0: #{actor_critic_forward.3}
  #allocation0 [shape = 'u32[]', space=smem, size = 0x4, offset = 0x4, fixed_abs, tag = 'smem constant byte address 0x4 - core index']
  #allocation1 [shape = 'u32[144,128]{1,0:T(1,128)}', space=vmem, size = 0x12000, scoped, tag = 'internal scratch']
  %s0 = inlined_call_operand.vmem [shape: bf16[125,512], index: 0, kind: input, shape index: {}]
  %s1 = inlined_call_operand.vmem [shape: bf16[512,8], index: 1, kind: input, shape index: {}]
  %s2 = inlined_call_operand.vmem [shape: f32[1,8], index: 2, kind: input, shape index: {}]
  %s3 = inlined_call_operand.vmem [shape: f32[125,8], index: 3, kind: output, shape index: {}]
  %s4 = sld [smem:[#allocation0]]
  $region45: #{actor_critic_forward.3} parent=0
    _
  %s6 = ssub.s32 1, %s4
  %s7 = scalar_select 0, %s6, %s4
  loop: start=0, step=1, limit=4
  $region2: #{actor_critic_forward.3} parent=0 // loop_pre_header
    _
  $region3: #{actor_critic_forward.3} parent=0 // loop_header
    %s9 = sphi 0, %s13
    %p10 = scmp.ge.s32.totalorder %s9, 4
    %s19 = sphi 0, %s21
    %s22 = sphi 0, %s19
    %s23 = sphi 0, %s22
    %s39 = sphi 0, %s23
    %s43 = sphi 0, %s43
    %s45 = sphi 0, %s43
    %s46 = sphi 0, %s45
    %s60 = sphi 0, %s46
    %s64 = sphi 0, %s64
    %s66 = sphi 0, %s64
    %s67 = sphi 0, %s66
    %s81 = sphi 0, %s67
    %s87 = sphi 0, %s89
    %s90 = sphi 0, %s87
    %s91 = sphi 0, %s90
    %s107 = sphi 0, %s91
  $region4: #{actor_critic_forward.3} parent=0 // loop_header_branch
    %12 = sbr.rel (%p10) target = $region8
  $region5: #{actor_critic_forward.3} parent=0 // loop_body
    %s14 = ssub.s32 %s9, 1
    %s15 = ssub.s32 %s9, 2
    %s16 = sadd.s32 %s9, 1
    %s17 = ssub.s32 %s9, %s16
    %p18 = scmp.eq.s32.totalorder %s17, 0
    %s20 = sadd.s32 %s19, 1
    %s21 = scalar_select %p18, %s19, %s20
    %p24 = pneg %p18
    %p25 = scmp.eq.s32.totalorder %s9, 1
    %p26 = por %p24, %p25
    %p27 = scmp.ne.s32.totalorder %s19, %s22
    %p28 = scmp.eq.s32.totalorder %s9, 0
    %p29 = por %p27, %p28
    %p30 = scmp.ne.s32.totalorder %s19, %s22
    %p31 = scmp.eq.s32.totalorder %s14, 1
    %p32 = por %p30, %p31
    %p33 = scmp.ne.s32.totalorder %s22, %s23
    %p34 = scmp.eq.s32.totalorder %s14, 0
    %p35 = por %p33, %p34
    %p36 = scmp.ne.s32.totalorder %s22, %s23
    %p37 = scmp.eq.s32.totalorder %s15, 1
    %p38 = por %p36, %p37
    %p40 = scmp.ne.s32.totalorder %s23, %s39
    %p41 = scmp.eq.s32.totalorder %s15, 0
    %p42 = por %p40, %p41
    %s44 = sadd.s32 %s43, 1
    %p47 = scmp.eq.s32.totalorder %s9, 1
    %p48 = scmp.ne.s32.totalorder %s43, %s45
    %p49 = scmp.eq.s32.totalorder %s9, 0
    %p50 = por %p48, %p49
    %p51 = scmp.ne.s32.totalorder %s43, %s45
    %p52 = scmp.eq.s32.totalorder %s14, 1
    %p53 = por %p51, %p52
    %p54 = scmp.ne.s32.totalorder %s45, %s46
    %p55 = scmp.eq.s32.totalorder %s14, 0
    %p56 = por %p54, %p55
    %p57 = scmp.ne.s32.totalorder %s45, %s46
    %p58 = scmp.eq.s32.totalorder %s15, 1
    %p59 = por %p57, %p58
    %p61 = scmp.ne.s32.totalorder %s46, %s60
    %p62 = scmp.eq.s32.totalorder %s15, 0
    %p63 = por %p61, %p62
    %s65 = sadd.s32 %s64, 1
    %p68 = scmp.eq.s32.totalorder %s9, 1
    %p69 = scmp.ne.s32.totalorder %s64, %s66
    %p70 = scmp.eq.s32.totalorder %s9, 0
    %p71 = por %p69, %p70
    %p72 = scmp.ne.s32.totalorder %s64, %s66
    %p73 = scmp.eq.s32.totalorder %s14, 1
    %p74 = por %p72, %p73
    %p75 = scmp.ne.s32.totalorder %s66, %s67
    %p76 = scmp.eq.s32.totalorder %s14, 0
    %p77 = por %p75, %p76
    %p78 = scmp.ne.s32.totalorder %s66, %s67
    %p79 = scmp.eq.s32.totalorder %s15, 1
    %p80 = por %p78, %p79
    %p82 = scmp.ne.s32.totalorder %s67, %s81
    %p83 = scmp.eq.s32.totalorder %s15, 0
    %p84 = por %p82, %p83
    %s85 = ssub.s32 %s9, %s16
    %p86 = scmp.eq.s32.totalorder %s85, 0
    %s88 = sadd.s32 %s87, 1
    %s89 = scalar_select %p86, %s87, %s88
    %p92 = pneg %p86
    %p93 = scmp.eq.s32.totalorder %s9, 1
    %p94 = por %p92, %p93
    %p95 = scmp.ne.s32.totalorder %s87, %s90
    %p96 = scmp.eq.s32.totalorder %s9, 0
    %p97 = por %p95, %p96
    %p98 = scmp.ne.s32.totalorder %s87, %s90
    %p99 = scmp.eq.s32.totalorder %s14, 1
    %p100 = por %p98, %p99
    %p101 = scmp.ne.s32.totalorder %s90, %s91
    %p102 = scmp.eq.s32.totalorder %s14, 0
    %p103 = por %p101, %p102
    %p104 = scmp.ne.s32.totalorder %s90, %s91
    %p105 = scmp.eq.s32.totalorder %s15, 1
    %p106 = por %p104, %p105
    %p108 = scmp.ne.s32.totalorder %s91, %s107
    %p109 = scmp.eq.s32.totalorder %s15, 0
    %p110 = por %p108, %p109
    %p111 = scmp.le.s32.totalorder 1, %s9
    %p112 = scmp.lt.s32.totalorder %s9, 3
    %p113 = pnand %p111, %p112
    %p114 = pneg %p113
    // Predicated region
    $region9: #{actor_critic_forward.3} parent=5 // pred_check
      _
    $region10: #{actor_critic_forward.3} parent=5 // pred_check_branch
      %116 = sbr.rel (%p113) target = $region12
    $region11: #{actor_critic_forward.3} parent=5 // pred_region
      %s117 = ssub.s32 %s9, 1
      // Predicated region
      $region13: #{actor_critic_forward.3} parent=11 // pred_check
        %p118 = pneg %p56
      $region14: #{actor_critic_forward.3} parent=11 // pred_check_branch
        %120 = sbr.rel (%p118) target = $region16
      $region15: #{actor_critic_forward.3} parent=11 // pred_region
        _
      $region16: #{actor_critic_forward.3} parent=11 // pred_fallthru
        _
      // Predicated region
      $region17: #{actor_critic_forward.3} parent=11 // pred_check
        %p121 = pneg %p77
      $region18: #{actor_critic_forward.3} parent=11 // pred_check_branch
        %123 = sbr.rel (%p121) target = $region20
      $region19: #{actor_critic_forward.3} parent=11 // pred_region
        _
      $region20: #{actor_critic_forward.3} parent=11 // pred_fallthru
        _
    $region12: #{actor_critic_forward.3} parent=5 // pred_fallthru
      _
    %p124 = scmp.lt.s32.totalorder %s9, 2
    // Predicated region
    $region21: #{actor_critic_forward.3} parent=5 // pred_check
      %p125 = pneg %p124
    $region22: #{actor_critic_forward.3} parent=5 // pred_check_branch
      %127 = sbr.rel (%p125) target = $region24
    $region23: #{actor_critic_forward.3} parent=5 // pred_region
      // Predicated region
      $region25: #{actor_critic_forward.3} parent=23 // pred_check
        %p128 = pneg %p29
      $region26: #{actor_critic_forward.3} parent=23 // pred_check_branch
        %130 = sbr.rel (%p128) target = $region28
      $region27: #{actor_critic_forward.3} parent=23 // pred_region
        %s131 = smul.u32 8, %s9
        %p132 = scmp.lt.s32.totalorder %s131, 15
        %s133 = scalar_select %p132, %s131, 15
        %s134 = smul.addr %s133, 4
        %s135 = smul.addr %s134, 4
        %s136 = scalar_lea.vmem %s0, %s135
        %s137 = smul.u32 8, %s9
      $region28: #{actor_critic_forward.3} parent=23 // pred_fallthru
        _
    $region24: #{actor_critic_forward.3} parent=5 // pred_fallthru
      _
    %p138 = scmp.le.s32.totalorder 1, %s9
    %p139 = scmp.lt.s32.totalorder %s9, 3
    %p140 = pnand %p138, %p139
    %p141 = pneg %p140
    // Predicated region
    $region29: #{actor_critic_forward.3} parent=5 // pred_check
      _
    $region30: #{actor_critic_forward.3} parent=5 // pred_check_branch
      %143 = sbr.rel (%p140) target = $region32
    $region31: #{actor_critic_forward.3} parent=5 // pred_region
      %s144 = ssub.s32 %s9, 1
      %s145 = smul.u32 8, %s14
      %p146 = scmp.lt.s32.totalorder %s145, 15
      %s147 = scalar_select %p146, %s145, 15
      %s148 = smul.addr %s147, 4
      %s149 = smul.addr %s148, 4
      %s150 = scalar_lea.vmem %s0, %s149
      %p151 = pneg %p35
      %p152 = pneg %p32
      %p153 = pneg %p56
      %p154 = pneg %p53
      %p155 = pneg %p77
      %p156 = pneg %p74
      %p157 = pneg %p103
      %p158 = pneg %p100
      %s159 = smul.u32 8, %s14
      %p160 = scmp.lt.s32.totalorder %s159, 15
      %s161 = scalar_select %p160, %s159, 15
      %s162 = smul.addr %s161, 8
      %s163 = scalar_lea.vmem %s3, %s162
      %s164 = smul.u32 8, %s14
      %p165 = scmp.lt.s32.totalorder %s164, 15
      %s166 = scalar_select %p165, %s164, 15
      %s167 = smul.addr %s166, 4
      %s168 = smul.addr %s167, 4
      %s169 = scalar_lea.vmem %s0, %s168
      %s170 = smul.u32 8, %s14
      %s171 = smul.u32 8, %s14
      %p172 = scmp.lt.s32.totalorder %s171, 15
      %s173 = scalar_select %p172, %s171, 15
      %s174 = smul.addr %s173, 8
      %s175 = scalar_lea.vmem %s3, %s174
      %s176 = smul.u32 8, %s14
      %v178 = vld [vmem:[%s169] sm:$0xff]
      %v179 = vld [vmem:[%s169 + $0x8] sm:$0xff]
      %v180 = vld [vmem:[%s169 + $0x10] sm:$0xff]
      %v181 = vld [vmem:[%s169 + $0x18] sm:$0xff]
      %v182 = vld [vmem:[%s169 + $0x20] sm:$0xff]
      %v183 = vld [vmem:[%s169 + $0x28] sm:$0xff]
      %v184 = vld [vmem:[%s169 + $0x30] sm:$0xff]
      %v185 = vld [vmem:[%s169 + $0x38] sm:$0xff]
      %v186 = vld [vmem:[%s169 + $0x40] sm:$0xff]
      %v187 = vld [vmem:[%s169 + $0x48] sm:$0xff]
      %v188 = vld [vmem:[%s169 + $0x50] sm:$0xff]
      %v189 = vld [vmem:[%s169 + $0x58] sm:$0xff]
      %v190 = vld [vmem:[%s169 + $0x60] sm:$0xff]
      %v191 = vld [vmem:[%s169 + $0x68] sm:$0xff]
      %v192 = vld [vmem:[%s169 + $0x70] sm:$0xff]
      %v193 = vld [vmem:[%s169 + $0x78] sm:$0xff]
      %v194 = vld [vmem:[%s1] sm:$0xf]
      %v195 = vld [vmem:[%s1 + $0x4] sm:$0xf]
      %v196 = vld [vmem:[%s1 + $0x8] sm:$0xf]
      %v197 = vld [vmem:[%s1 + $0xc] sm:$0xf]
      %v198 = vld [vmem:[%s1 + $0x10] sm:$0xf]
      %v199 = vld [vmem:[%s1 + $0x14] sm:$0xf]
      %v200 = vld [vmem:[%s1 + $0x18] sm:$0xf]
      %v201 = vld [vmem:[%s1 + $0x1c] sm:$0xf]
      %v202 = vld [vmem:[%s1 + $0x20] sm:$0xf]
      %v203 = vld [vmem:[%s1 + $0x24] sm:$0xf]
      %v204 = vld [vmem:[%s1 + $0x28] sm:$0xf]
      %v205 = vld [vmem:[%s1 + $0x2c] sm:$0xf]
      %v206 = vld [vmem:[%s1 + $0x30] sm:$0xf]
      %v207 = vld [vmem:[%s1 + $0x34] sm:$0xf]
      %v208 = vld [vmem:[%s1 + $0x38] sm:$0xf]
      %v209 = vld [vmem:[%s1 + $0x3c] sm:$0xf]
      %v210 = vld [vmem:[%s1 + $0x40] sm:$0xf]
      %v211 = vld [vmem:[%s1 + $0x44] sm:$0xf]
      %v212 = vld [vmem:[%s1 + $0x48] sm:$0xf]
      %v213 = vld [vmem:[%s1 + $0x4c] sm:$0xf]
      %v214 = vld [vmem:[%s1 + $0x50] sm:$0xf]
      %v215 = vld [vmem:[%s1 + $0x54] sm:$0xf]
      %v216 = vld [vmem:[%s1 + $0x58] sm:$0xf]
      %v217 = vld [vmem:[%s1 + $0x5c] sm:$0xf]
      %v218 = vld [vmem:[%s1 + $0x60] sm:$0xf]
      %v219 = vld [vmem:[%s1 + $0x64] sm:$0xf]
      %v220 = vld [vmem:[%s1 + $0x68] sm:$0xf]
      %v221 = vld [vmem:[%s1 + $0x6c] sm:$0xf]
      %v222 = vld [vmem:[%s1 + $0x70] sm:$0xf]
      %v223 = vld [vmem:[%s1 + $0x74] sm:$0xf]
      %v224 = vld [vmem:[%s1 + $0x78] sm:$0xf]
      %v225 = vld [vmem:[%s1 + $0x7c] sm:$0xf]
      %v226 = vld [vmem:[%s1 + $0x80] sm:$0xf]
      %v227 = vld [vmem:[%s1 + $0x84] sm:$0xf]
      %v228 = vld [vmem:[%s1 + $0x88] sm:$0xf]
      %v229 = vld [vmem:[%s1 + $0x8c] sm:$0xf]
      %v230 = vld [vmem:[%s1 + $0x90] sm:$0xf]
      %v231 = vld [vmem:[%s1 + $0x94] sm:$0xf]
      %v232 = vld [vmem:[%s1 + $0x98] sm:$0xf]
      %v233 = vld [vmem:[%s1 + $0x9c] sm:$0xf]
      %v234 = vld [vmem:[%s1 + $0xa0] sm:$0xf]
      %v235 = vld [vmem:[%s1 + $0xa4] sm:$0xf]
      %v236 = vld [vmem:[%s1 + $0xa8] sm:$0xf]
      %v237 = vld [vmem:[%s1 + $0xac] sm:$0xf]
      %v238 = vld [vmem:[%s1 + $0xb0] sm:$0xf]
      %v239 = vld [vmem:[%s1 + $0xb4] sm:$0xf]
      %v240 = vld [vmem:[%s1 + $0xb8] sm:$0xf]
      %v241 = vld [vmem:[%s1 + $0xbc] sm:$0xf]
      %v242 = vld [vmem:[%s1 + $0xc0] sm:$0xf]
      %v243 = vld [vmem:[%s1 + $0xc4] sm:$0xf]
      %v244 = vld [vmem:[%s1 + $0xc8] sm:$0xf]
      %v245 = vld [vmem:[%s1 + $0xcc] sm:$0xf]
      %v246 = vld [vmem:[%s1 + $0xd0] sm:$0xf]
      %v247 = vld [vmem:[%s1 + $0xd4] sm:$0xf]
      %v248 = vld [vmem:[%s1 + $0xd8] sm:$0xf]
      %v249 = vld [vmem:[%s1 + $0xdc] sm:$0xf]
      %v250 = vld [vmem:[%s1 + $0xe0] sm:$0xf]
      %v251 = vld [vmem:[%s1 + $0xe4] sm:$0xf]
      %v252 = vld [vmem:[%s1 + $0xe8] sm:$0xf]
      %v253 = vld [vmem:[%s1 + $0xec] sm:$0xf]
      %v254 = vld [vmem:[%s1 + $0xf0] sm:$0xf]
      %v255 = vld [vmem:[%s1 + $0xf4] sm:$0xf]
      %v256 = vld [vmem:[%s1 + $0xf8] sm:$0xf]
      %v257 = vld [vmem:[%s1 + $0xfc] sm:$0xf]
      %v258 = vld [vmem:[%s2] sm:$0x1]
      %v260 = vlaneseq
      %v261 = vshrl.u32 %v260, 7
      %v262 = vsub.s32 0, %v261
      %v263 = vrot.slane %v258, %v262
      %v281 = vunpack.c.l.b16 %v178
      %v282 = vunpack.c.h.b16 %v178
      %v283 = vunpack.c.l.b16 %v179
      %v284 = vunpack.c.h.b16 %v179
      %v285 = vunpack.c.l.b16 %v180
      %v286 = vunpack.c.h.b16 %v180
      %v287 = vunpack.c.l.b16 %v181
      %v288 = vunpack.c.h.b16 %v181
      %v289 = vunpack.c.l.b16 %v182
      %v290 = vunpack.c.h.b16 %v182
      %v291 = vunpack.c.l.b16 %v183
      %v292 = vunpack.c.h.b16 %v183
      %v293 = vunpack.c.l.b16 %v184
      %v294 = vunpack.c.h.b16 %v184
      %v295 = vunpack.c.l.b16 %v185
      %v296 = vunpack.c.h.b16 %v185
      %v297 = vunpack.c.l.b16 %v186
      %v298 = vunpack.c.h.b16 %v186
      %v299 = vunpack.c.l.b16 %v187
      %v300 = vunpack.c.h.b16 %v187
      %v301 = vunpack.c.l.b16 %v188
      %v302 = vunpack.c.h.b16 %v188
      %v303 = vunpack.c.l.b16 %v189
      %v304 = vunpack.c.h.b16 %v189
      %v305 = vunpack.c.l.b16 %v190
      %v306 = vunpack.c.h.b16 %v190
      %v307 = vunpack.c.l.b16 %v191
      %v308 = vunpack.c.h.b16 %v191
      %v309 = vunpack.c.l.b16 %v192
      %v310 = vunpack.c.h.b16 %v192
      %v311 = vunpack.c.l.b16 %v193
      %v312 = vunpack.c.h.b16 %v193
      %v313 = vpack.c.b16 %v285, %v281
      %v314 = vpack.c.b16 %v286, %v282
      %v315 = vpack.c.b16 %v287, %v283
      %v316 = vpack.c.b16 %v288, %v284
      %v317 = vpack.c.b16 %v293, %v289
      %v318 = vpack.c.b16 %v294, %v290
      %v319 = vpack.c.b16 %v295, %v291
      %v320 = vpack.c.b16 %v296, %v292
      %v321 = vpack.c.b16 %v301, %v297
      %v322 = vpack.c.b16 %v302, %v298
      %v323 = vpack.c.b16 %v303, %v299
      %v324 = vpack.c.b16 %v304, %v300
      %v325 = vpack.c.b16 %v309, %v305
      %v326 = vpack.c.b16 %v310, %v306
      %v327 = vpack.c.b16 %v311, %v307
      %v328 = vpack.c.b16 %v312, %v308
      %v409 = vunpack.c.l.b16 %v194
      %v410 = vunpack.c.l.b16 %v195
      %v411 = vunpack.c.l.b16 %v196
      %v412 = vunpack.c.l.b16 %v197
      %v413 = vunpack.c.l.b16 %v198
      %v414 = vunpack.c.l.b16 %v199
      %v415 = vunpack.c.l.b16 %v200
      %v416 = vunpack.c.l.b16 %v201
      %v417 = vunpack.c.l.b16 %v202
      %v418 = vunpack.c.l.b16 %v203
      %v419 = vunpack.c.l.b16 %v204
      %v420 = vunpack.c.l.b16 %v205
      %v421 = vunpack.c.l.b16 %v206
      %v422 = vunpack.c.l.b16 %v207
      %v423 = vunpack.c.l.b16 %v208
      %v424 = vunpack.c.l.b16 %v209
      %v425 = vunpack.c.l.b16 %v210
      %v426 = vunpack.c.l.b16 %v211
      %v427 = vunpack.c.l.b16 %v212
      %v428 = vunpack.c.l.b16 %v213
      %v429 = vunpack.c.l.b16 %v214
      %v430 = vunpack.c.l.b16 %v215
      %v431 = vunpack.c.l.b16 %v216
      %v432 = vunpack.c.l.b16 %v217
      %v433 = vunpack.c.l.b16 %v218
      %v434 = vunpack.c.l.b16 %v219
      %v435 = vunpack.c.l.b16 %v220
      %v436 = vunpack.c.l.b16 %v221
      %v437 = vunpack.c.l.b16 %v222
      %v438 = vunpack.c.l.b16 %v223
      %v439 = vunpack.c.l.b16 %v224
      %v440 = vunpack.c.l.b16 %v225
      %v441 = vunpack.c.l.b16 %v226
      %v442 = vunpack.c.l.b16 %v227
      %v443 = vunpack.c.l.b16 %v228
      %v444 = vunpack.c.l.b16 %v229
      %v445 = vunpack.c.l.b16 %v230
      %v446 = vunpack.c.l.b16 %v231
      %v447 = vunpack.c.l.b16 %v232
      %v448 = vunpack.c.l.b16 %v233
      %v449 = vunpack.c.l.b16 %v234
      %v450 = vunpack.c.l.b16 %v235
      %v451 = vunpack.c.l.b16 %v236
      %v452 = vunpack.c.l.b16 %v237
      %v453 = vunpack.c.l.b16 %v238
      %v454 = vunpack.c.l.b16 %v239
      %v455 = vunpack.c.l.b16 %v240
      %v456 = vunpack.c.l.b16 %v241
      %v457 = vunpack.c.l.b16 %v242
      %v458 = vunpack.c.l.b16 %v243
      %v459 = vunpack.c.l.b16 %v244
      %v460 = vunpack.c.l.b16 %v245
      %v461 = vunpack.c.l.b16 %v246
      %v462 = vunpack.c.l.b16 %v247
      %v463 = vunpack.c.l.b16 %v248
      %v464 = vunpack.c.l.b16 %v249
      %v465 = vunpack.c.l.b16 %v250
      %v466 = vunpack.c.l.b16 %v251
      %v467 = vunpack.c.l.b16 %v252
      %v468 = vunpack.c.l.b16 %v253
      %v469 = vunpack.c.l.b16 %v254
      %v470 = vunpack.c.l.b16 %v255
      %v471 = vunpack.c.l.b16 %v256
      %v472 = vunpack.c.l.b16 %v257
      %v473 = vpack.c.b16 %v410, %v409
      %v474 = vpack.c.b16 %v412, %v411
      %v475 = vpack.c.b16 %v414, %v413
      %v476 = vpack.c.b16 %v416, %v415
      %v477 = vpack.c.b16 %v418, %v417
      %v478 = vpack.c.b16 %v420, %v419
      %v479 = vpack.c.b16 %v422, %v421
      %v480 = vpack.c.b16 %v424, %v423
      %v481 = vpack.c.b16 %v426, %v425
      %v482 = vpack.c.b16 %v428, %v427
      %v483 = vpack.c.b16 %v430, %v429
      %v484 = vpack.c.b16 %v432, %v431
      %v485 = vpack.c.b16 %v434, %v433
      %v486 = vpack.c.b16 %v436, %v435
      %v487 = vpack.c.b16 %v438, %v437
      %v488 = vpack.c.b16 %v440, %v439
      %v489 = vpack.c.b16 %v442, %v441
      %v490 = vpack.c.b16 %v444, %v443
      %v491 = vpack.c.b16 %v446, %v445
      %v492 = vpack.c.b16 %v448, %v447
      %v493 = vpack.c.b16 %v450, %v449
      %v494 = vpack.c.b16 %v452, %v451
      %v495 = vpack.c.b16 %v454, %v453
      %v496 = vpack.c.b16 %v456, %v455
      %v497 = vpack.c.b16 %v458, %v457
      %v498 = vpack.c.b16 %v460, %v459
      %v499 = vpack.c.b16 %v462, %v461
      %v500 = vpack.c.b16 %v464, %v463
      %v501 = vpack.c.b16 %v466, %v465
      %v502 = vpack.c.b16 %v468, %v467
      %v503 = vpack.c.b16 %v470, %v469
      %v504 = vpack.c.b16 %v472, %v471
      %537 = vmatprep.subr.bf16.mxu0 0
      %538 = vmatpush1.bf16.msra.mxu0 %v480
      %539 = vmatprep.subr.bf16.mxu0 0
      %540 = vmatpush1.bf16.msra.mxu0 %v479
      %541 = vmatprep.subr.bf16.mxu0 0
      %542 = vmatpush1.bf16.msra.mxu0 %v478
      %543 = vmatprep.subr.bf16.mxu0 0
      %544 = vmatpush1.bf16.msra.mxu0 %v477
      %545 = vmatprep.subr.bf16.mxu0 0
      %546 = vmatpush1.bf16.msra.mxu0 %v476
      %547 = vmatprep.subr.bf16.mxu0 0
      %548 = vmatpush1.bf16.msra.mxu0 %v475
      %549 = vmatprep.subr.bf16.mxu0 0
      %550 = vmatpush1.bf16.msra.mxu0 %v474
      %551 = vmatprep.subr.bf16.mxu0 0
      %552 = vmatpush1.bf16.msra.mxu0 %v473
      %553 = vmatprep.subr.bf16.mxu0 0
      %554 = vmatpush2.bf16.msra.mxu0 %v488
      %555 = vmatprep.subr.bf16.mxu0 0
      %556 = vmatpush2.bf16.msra.mxu0 %v487
      %557 = vmatprep.subr.bf16.mxu0 0
      %558 = vmatpush2.bf16.msra.mxu0 %v486
      %559 = vmatprep.subr.bf16.mxu0 0
      %560 = vmatpush2.bf16.msra.mxu0 %v485
      %561 = vmatprep.subr.bf16.mxu0 0
      %562 = vmatpush2.bf16.msra.mxu0 %v484
      %563 = vmatprep.subr.bf16.mxu0 0
      %564 = vmatpush2.bf16.msra.mxu0 %v483
      %565 = vmatprep.subr.bf16.mxu0 0
      %566 = vmatpush2.bf16.msra.mxu0 %v482
      %567 = vmatprep.subr.bf16.mxu0 0
      %568 = vmatpush2.bf16.msra.mxu0 %v481
      %569 = vmatprep.mubr.bf16.mxu0 %v314
      %570 = vmatmul.mubr.bf16.gmra.mxu0 %v313
      %v571 = vpop.f32.mrf.mxu0
      %v572 = vadd.f32 %v263, %v571
      %v573 = vpop.f32.mrf.mxu0
      %v574 = vpop.f32.mrf.mxu0
      %v575 = vadd.f32 %v263, %v574
      %v576 = vpop.f32.mrf.mxu0
      %577 = vmatprep.mubr.bf16.mxu0 %v318
      %578 = vmatmul.mubr.bf16.gmra.mxu0 %v317
      %v579 = vpop.f32.mrf.mxu0
      %v580 = vadd.f32 %v263, %v579
      %v581 = vpop.f32.mrf.mxu0
      %v582 = vpop.f32.mrf.mxu0
      %v583 = vadd.f32 %v263, %v582
      %v584 = vpop.f32.mrf.mxu0
      %585 = vmatprep.mubr.bf16.mxu0 %v322
      %586 = vmatmul.mubr.bf16.gmra.mxu0 %v321
      %v587 = vpop.f32.mrf.mxu0
      %v588 = vadd.f32 %v263, %v587
      %v589 = vpop.f32.mrf.mxu0
      %v590 = vpop.f32.mrf.mxu0
      %v591 = vadd.f32 %v263, %v590
      %v592 = vpop.f32.mrf.mxu0
      %593 = vmatprep.mubr.bf16.mxu0 %v326
      %594 = vmatmul.mubr.bf16.gmra.mxu0 %v325
      %v595 = vpop.f32.mrf.mxu0
      %v596 = vadd.f32 %v263, %v595
      %v597 = vpop.f32.mrf.mxu0
      %v598 = vpop.f32.mrf.mxu0
      %v599 = vadd.f32 %v263, %v598
      %v600 = vpop.f32.mrf.mxu0
      %601 = vdwg.mxu0
      %602 = vmatprep.subr.bf16.mxu0 0
      %603 = vmatpush1.bf16.msra.mxu0 %v496
      %604 = vmatprep.subr.bf16.mxu0 0
      %605 = vmatpush1.bf16.msra.mxu0 %v495
      %606 = vmatprep.subr.bf16.mxu0 0
      %607 = vmatpush1.bf16.msra.mxu0 %v494
      %608 = vmatprep.subr.bf16.mxu0 0
      %609 = vmatpush1.bf16.msra.mxu0 %v493
      %610 = vmatprep.subr.bf16.mxu0 0
      %611 = vmatpush1.bf16.msra.mxu0 %v492
      %612 = vmatprep.subr.bf16.mxu0 0
      %613 = vmatpush1.bf16.msra.mxu0 %v491
      %614 = vmatprep.subr.bf16.mxu0 0
      %615 = vmatpush1.bf16.msra.mxu0 %v490
      %616 = vmatprep.subr.bf16.mxu0 0
      %617 = vmatpush1.bf16.msra.mxu0 %v489
      %618 = vmatprep.subr.bf16.mxu0 0
      %619 = vmatpush2.bf16.msra.mxu0 %v504
      %620 = vmatprep.subr.bf16.mxu0 0
      %621 = vmatpush2.bf16.msra.mxu0 %v503
      %622 = vmatprep.subr.bf16.mxu0 0
      %623 = vmatpush2.bf16.msra.mxu0 %v502
      %624 = vmatprep.subr.bf16.mxu0 0
      %625 = vmatpush2.bf16.msra.mxu0 %v501
      %626 = vmatprep.subr.bf16.mxu0 0
      %627 = vmatpush2.bf16.msra.mxu0 %v500
      %628 = vmatprep.subr.bf16.mxu0 0
      %629 = vmatpush2.bf16.msra.mxu0 %v499
      %630 = vmatprep.subr.bf16.mxu0 0
      %631 = vmatpush2.bf16.msra.mxu0 %v498
      %632 = vmatprep.subr.bf16.mxu0 0
      %633 = vmatpush2.bf16.msra.mxu0 %v497
      %634 = vmatprep.mubr.bf16.mxu0 %v316
      %635 = vmatmul.mubr.bf16.gmra.mxu0 %v315
      %v636 = vpop.f32.mrf.mxu0
      %v637 = vadd.f32 %v572, %v636
      %v638 = vpop.f32.mrf.mxu0
      %v639 = vpop.f32.mrf.mxu0
      %v640 = vadd.f32 %v575, %v639
      %v641 = vpop.f32.mrf.mxu0
      %642 = vmatprep.mubr.bf16.mxu0 %v320
      %643 = vmatmul.mubr.bf16.gmra.mxu0 %v319
      %v644 = vpop.f32.mrf.mxu0
      %v645 = vadd.f32 %v580, %v644
      %v646 = vpop.f32.mrf.mxu0
      %v647 = vpop.f32.mrf.mxu0
      %v648 = vadd.f32 %v583, %v647
      %v649 = vpop.f32.mrf.mxu0
      %650 = vmatprep.mubr.bf16.mxu0 %v324
      %651 = vmatmul.mubr.bf16.gmra.mxu0 %v323
      %v652 = vpop.f32.mrf.mxu0
      %v653 = vadd.f32 %v588, %v652
      %v654 = vpop.f32.mrf.mxu0
      %v655 = vpop.f32.mrf.mxu0
      %v656 = vadd.f32 %v591, %v655
      %v657 = vpop.f32.mrf.mxu0
      %658 = vmatprep.mubr.bf16.mxu0 %v328
      %659 = vmatmul.mubr.bf16.gmra.mxu0 %v327
      %v660 = vpop.f32.mrf.mxu0
      %v661 = vadd.f32 %v596, %v660
      %v662 = vpop.f32.mrf.mxu0
      %v663 = vpop.f32.mrf.mxu0
      %v664 = vadd.f32 %v599, %v663
      %v665 = vpop.f32.mrf.mxu0
      %666 = vdwg.mxu0
      %v667 = vlaneseq
      %v668 = vand.u32 %v667, 127
      %vm669 = vcmp.ge.s32.totalorder %v668, 1
      %v670 = vsel %vm669, %v637, -inf
      %v671 = vsel %vm669, %v640, -inf
      %v672 = vsel %vm669, %v645, -inf
      %v673 = vsel %vm669, %v648, -inf
      %v674 = vsel %vm669, %v653, -inf
      %v675 = vsel %vm669, %v656, -inf
      %v676 = vsel %vm669, %v661, -inf
      %v677 = vsel %vm669, %v664, -inf
      %vm678 = vcmask 64512
      %v679 = vsel %vm678, %v670, -inf
      %680 = vmax.xlane.f32.xlu0 %v679
      %v681 = vpop.xlane.xlu0 %680
      %v682 = vsel %vm678, %v671, -inf
      %683 = vmax.xlane.f32.xlu0 %v682
      %v684 = vpop.xlane.xlu0 %683
      %v685 = vsel %vm678, %v672, -inf
      %686 = vmax.xlane.f32.xlu0 %v685
      %v687 = vpop.xlane.xlu0 %686
      %v688 = vsel %vm678, %v673, -inf
      %689 = vmax.xlane.f32.xlu0 %v688
      %v690 = vpop.xlane.xlu0 %689
      %v691 = vsel %vm678, %v674, -inf
      %692 = vmax.xlane.f32.xlu0 %v691
      %v693 = vpop.xlane.xlu0 %692
      %v694 = vsel %vm678, %v675, -inf
      %695 = vmax.xlane.f32.xlu0 %v694
      %v696 = vpop.xlane.xlu0 %695
      %v697 = vsel %vm678, %v676, -inf
      %698 = vmax.xlane.f32.xlu0 %v697
      %v699 = vpop.xlane.xlu0 %698
      %v700 = vsel %vm678, %v677, -inf
      %701 = vmax.xlane.f32.xlu0 %v700
      %v702 = vpop.xlane.xlu0 %701
      %v703 = vsub.f32 %v670, %v681
      %v704 = vsub.f32 %v671, %v684
      %v705 = vsub.f32 %v672, %v687
      %v706 = vsub.f32 %v673, %v690
      %v707 = vsub.f32 %v674, %v693
      %v708 = vsub.f32 %v675, %v696
      %v709 = vsub.f32 %v676, %v699
      %v710 = vsub.f32 %v677, %v702
      %v711 = vmul.f32 %v703, 1.442695
      %v712 = vpow.pop %v711
      %v713 = vmul.f32 %v704, 1.442695
      %v714 = vpow.pop %v713
      %v715 = vmul.f32 %v705, 1.442695
      %v716 = vpow.pop %v715
      %v717 = vmul.f32 %v706, 1.442695
      %v718 = vpow.pop %v717
      %v719 = vmul.f32 %v707, 1.442695
      %v720 = vpow.pop %v719
      %v721 = vmul.f32 %v708, 1.442695
      %v722 = vpow.pop %v721
      %v723 = vmul.f32 %v709, 1.442695
      %v724 = vpow.pop %v723
      %v725 = vmul.f32 %v710, 1.442695
      %v726 = vpow.pop %v725
      %v727 = vsel %vm678, %v712, 0.0
      %728 = vadd.xlane.f32.xlu0 %v727
      %v729 = vpop.xlane.xlu0 %728
      %v730 = vsel %vm678, %v714, 0.0
      %731 = vadd.xlane.f32.xlu0 %v730
      %v732 = vpop.xlane.xlu0 %731
      %v733 = vsel %vm678, %v716, 0.0
      %734 = vadd.xlane.f32.xlu0 %v733
      %v735 = vpop.xlane.xlu0 %734
      %v736 = vsel %vm678, %v718, 0.0
      %737 = vadd.xlane.f32.xlu0 %v736
      %v738 = vpop.xlane.xlu0 %737
      %v739 = vsel %vm678, %v720, 0.0
      %740 = vadd.xlane.f32.xlu0 %v739
      %v741 = vpop.xlane.xlu0 %740
      %v742 = vsel %vm678, %v722, 0.0
      %743 = vadd.xlane.f32.xlu0 %v742
      %v744 = vpop.xlane.xlu0 %743
      %v745 = vsel %vm678, %v724, 0.0
      %746 = vadd.xlane.f32.xlu0 %v745
      %v747 = vpop.xlane.xlu0 %746
      %v748 = vsel %vm678, %v726, 0.0
      %749 = vadd.xlane.f32.xlu0 %v748
      %v750 = vpop.xlane.xlu0 %749
      %v751 = vrcp.pop %v729
      %v752 = vmul.f32 1.0, %v751
      %v753 = vrcp.pop %v732
      %v754 = vmul.f32 1.0, %v753
      %v755 = vrcp.pop %v735
      %v756 = vmul.f32 1.0, %v755
      %v757 = vrcp.pop %v738
      %v758 = vmul.f32 1.0, %v757
      %v759 = vrcp.pop %v741
      %v760 = vmul.f32 1.0, %v759
      %v761 = vrcp.pop %v744
      %v762 = vmul.f32 1.0, %v761
      %v763 = vrcp.pop %v747
      %v764 = vmul.f32 1.0, %v763
      %v765 = vrcp.pop %v750
      %v766 = vmul.f32 1.0, %v765
      %v767 = vmul.f32 %v712, %v752
      %v768 = vmul.f32 %v714, %v754
      %v769 = vmul.f32 %v716, %v756
      %v770 = vmul.f32 %v718, %v758
      %v771 = vmul.f32 %v720, %v760
      %v772 = vmul.f32 %v722, %v762
      %v773 = vmul.f32 %v724, %v764
      %v774 = vmul.f32 %v726, %v766
      %vm775 = vcmp.eq.s32.totalorder %v668, 0
      %v776 = vsel %vm775, %v637, %v767
      %v777 = vsel %vm775, %v640, %v768
      %v778 = vsel %vm775, %v645, %v769
      %v779 = vsel %vm775, %v648, %v770
      %v780 = vsel %vm775, %v653, %v771
      %v781 = vsel %vm775, %v656, %v772
      %v782 = vsel %vm775, %v661, %v773
      %v783 = vsel %vm775, %v664, %v774
      %784 = vst.msk [vmem:[%s175] sm:$0xff] %vm678, %v776
      %785 = vst.msk [vmem:[%s175 + $0x8] sm:$0xff] %vm678, %v777
      %786 = vst.msk [vmem:[%s175 + $0x10] sm:$0xff] %vm678, %v778
      %787 = vst.msk [vmem:[%s175 + $0x18] sm:$0xff] %vm678, %v779
      %788 = vst.msk [vmem:[%s175 + $0x20] sm:$0xff] %vm678, %v780
      %789 = vst.msk [vmem:[%s175 + $0x28] sm:$0xff] %vm678, %v781
      %790 = vst.msk [vmem:[%s175 + $0x30] sm:$0xff] %vm678, %v782
      %791 = vst.msk [vmem:[%s175 + $0x38] sm:$0xff] %vm678, %v783
      %s792 = smul.u32 8, %s14
      %p793 = scmp.lt.s32.totalorder %s792, 15
      %s794 = scalar_select %p793, %s792, 15
      %s795 = smul.addr %s794, 8
      %s796 = scalar_lea.vmem %s3, %s795
      // Predicated region
      $region33: #{actor_critic_forward.3} parent=31 // pred_check
        %p797 = pneg %p100
      $region34: #{actor_critic_forward.3} parent=31 // pred_check_branch
        %799 = sbr.rel (%p797) target = $region36
      $region35: #{actor_critic_forward.3} parent=31 // pred_region
        %s800 = smul.u32 8, %s14
      $region36: #{actor_critic_forward.3} parent=31 // pred_fallthru
        _
    $region32: #{actor_critic_forward.3} parent=5 // pred_fallthru
      _
    %p801 = scmp.le.s32.totalorder 2, %s9
    // Predicated region
    $region37: #{actor_critic_forward.3} parent=5 // pred_check
      %p802 = pneg %p801
    $region38: #{actor_critic_forward.3} parent=5 // pred_check_branch
      %804 = sbr.rel (%p802) target = $region40
    $region39: #{actor_critic_forward.3} parent=5 // pred_region
      %s805 = ssub.s32 %s9, 2
      // Predicated region
      $region41: #{actor_critic_forward.3} parent=39 // pred_check
        %p806 = pneg %p106
      $region42: #{actor_critic_forward.3} parent=39 // pred_check_branch
        %808 = sbr.rel (%p806) target = $region44
      $region43: #{actor_critic_forward.3} parent=39 // pred_region
        %s809 = smul.u32 8, %s15
        %p810 = scmp.lt.s32.totalorder %s809, 15
        %s811 = scalar_select %p810, %s809, 15
        %s812 = smul.addr %s811, 8
        %s813 = scalar_lea.vmem %s3, %s812
      $region44: #{actor_critic_forward.3} parent=39 // pred_fallthru
        _
    $region40: #{actor_critic_forward.3} parent=5 // pred_fallthru
      _
  $region6: #{actor_critic_forward.3} parent=0 // loop_footer
    %s13 = sadd.s32 1, %s9
  $region7: #{actor_critic_forward.3} parent=0 // loop_footer_branch
    %8 = sbr.rel target = $region3
  $region8: #{actor_critic_forward.3} parent=0 // loop_exit
    _

</llo_original>
